<compile_context>
chip_gen: v5e
topology: v5e:2x2
jax: 0.10.0
libtpu: 0.0.40
codegen_flags: <defaults>
</compile_context>

<pallas_src>
import functools
import math

import jax
import jax.numpy as jnp
from jax import lax
from jax.experimental import pallas as pl
from jax.experimental.pallas import tpu as pltpu


# ------------------------------ Pallas kernel --------------------------------

def _mha_kernel(q_ref, kp_ref, vp_ref, wq_ref, bq_ref, wo_ref, bo_ref, o_ref,
                *, n_head: int, exp_dtype):
    """One grid step == one (batch, query-tile).

    Refs (per grid step):
      q_ref : (1, TQ, D)     bf16  query activations (this tile)
      kp_ref: (H, Skv, d_k)  bf16  pre-projected keys   (head-major, this batch)
      vp_ref: (H, Skv, d_k)  bf16  pre-projected values (head-major, this batch)
      wq_ref: (H, D, d_k)    bf16  Q projection weights (1/sqrt(d_k) folded in)
      bq_ref: (H, 1, d_k)    f32   Q projection bias    (1/sqrt(d_k) folded in)
      wo_ref: (H, d_k, D)    bf16  output projection weights, split per head
      bo_ref: (1, D)         f32   output projection bias
      o_ref : (1, TQ, D)     f32   output tile
    """
    q_bf = q_ref[0]                                   # (TQ, D) bf16
    tq, d_model = q_bf.shape

    def head_body(h, acc):
        # Per-head Q projection: bf16 x bf16 on the MXU, f32 accumulation.
        # (scale already folded into wq/bq; lane-aligned (TQ, d_k) result.)
        qh = (jnp.dot(q_bf, wq_ref[h], preferred_element_type=jnp.float32)
              + bq_ref[h]).astype(jnp.bfloat16)       # (TQ, d_k)
        kh = kp_ref[h]                                # (Skv, d_k) bf16
        vh = vp_ref[h]                                # (Skv, d_k) bf16

        # scores = Qh @ Kh^T: contract the last axis of both (no transpose).
        scores = lax.dot_general(qh, kh, (((1,), (1,)), ((), ())),
                                 preferred_element_type=jnp.float32)   # (TQ, Skv)

        # Numerically-stable softmax.  exp in bf16 on v6e/v7x (bf16 EUP), f32 on
        # v5e; row-sum accumulated in f32; 1/sum via the approx EUP reciprocal,
        # folded once into the P@V result.
        m = jnp.max(scores, axis=-1, keepdims=True)
        p = jnp.exp((scores - m).astype(exp_dtype))
        l = jnp.sum(p, axis=-1, keepdims=True, dtype=jnp.float32)
        inv_l = pl.reciprocal(l, approx=True)

        head = jnp.dot(p.astype(jnp.bfloat16), vh,
                       preferred_element_type=jnp.float32) * inv_l      # (TQ, d_k)

        # Per-head slice of the output projection (no concatenate, no ctx scratch):
        #   concat(head_0..H-1) @ Wo  ==  sum_h head_h @ Wo[h*d_k:(h+1)*d_k, :]
        return acc + jnp.dot(head.astype(jnp.bfloat16), wo_ref[h],
                             preferred_element_type=jnp.float32)        # (TQ, D)

    acc = lax.fori_loop(0, n_head, head_body,
                        jnp.zeros((tq, d_model), jnp.float32))
    o_ref[0] = (acc + bo_ref[...]).astype(o_ref.dtype)


# ------------------------------ wrapper helpers -------------------------------

def _vmem_capacity_bytes() -> int:
    """Physical VMEM of the local TPU generation (conservative fallback: 64 MiB)."""
    try:
        cap = int(pltpu.get_tpu_info().vmem_capacity_bytes)
        if cap > 0:
            return cap
    except Exception:
        pass
    return 64 * 1024 * 1024          # v7x per-TensorCore VMEM (smallest generation)


def _bf16_eup_available() -> bool:
    """bf16 transcendentals (EUP/VPU) exist on v6e/v7x; v5e and older lack them."""
    try:
        kind = jax.devices()[0].device_kind.lower()
    except Exception:
        return False
    return any(g in kind for g in ("v6", "v7"))


def _pick_q_tile(seq_q: int, seq_kv: int, *, vmem_capacity: int) -> int:
    """Largest 8-aligned tile dividing seq_q whose live f32 score+prob temporaries
    (~2*TQ*Skv*4B) stay within ~1/8 of physical VMEM (≈8 MiB v7x, ≈16 MiB v5e/v6e).
    Never shrinks below 256 just to save VMEM (MXU M-dim efficiency)."""
    budget = vmem_capacity // 8
    divisors = [c for c in (1024, 512, 256, 128, 64, 32, 16, 8) if seq_q % c == 0]
    if not divisors:
        return seq_q                  # tiny / odd sequence: one full-dim block
    for cand in divisors:
        if 2 * cand * seq_kv * 4 <= budget or cand <= 256:
            return cand
    return divisors[-1]


def _estimate_vmem_bytes(q_tile, skv, d_model, n_head, d_k, *,
                         single_buffer_weights: bool, exp_bytes: int) -> int:
    """Per-grid-step VMEM: pipeline buffers + resident weights + live temporaries."""
    hdk = n_head * d_k
    act = 2 * q_tile * d_model * 2            # q block (bf16), double buffered
    act += 2 * q_tile * d_model * 4           # out block (f32), double buffered
    act += 2 * 2 * skv * hdk * 2              # kp + vp blocks (bf16), double buffered
    wbuf = 1 if single_buffer_weights else 2
    weights = wbuf * (2 * d_model * hdk * 2   # wq + wo (bf16)
                      + hdk * 4 + d_model * 4)  # bq + bo (f32)
    live = q_tile * skv * 4                   # scores (f32)
    live += q_tile * skv * exp_bytes          # p (exp dtype)
    live += q_tile * d_model * 4              # f32 output accumulator
    live += 2 * (q_tile + skv) * d_k * 2      # qh / kh / vh / head tiles (bf16)
    return act + weights + live


# --------------------------------- wrapper ------------------------------------

def multi_head_attention(q, k, v, params, *, n_head: int, d_k: int,
                         q_tile: int | None = None,
                         vmem_limit_bytes: int | None = None,
                         single_buffer_weights: bool = True,
                         exp_in_bf16: bool | None = None):
    """q: (B, Sq, D); k, v: (B, Skv, D), float32. Returns (B, Sq, D) float32."""
    B, Sq, D = q.shape
    Skv = k.shape[1]
    HDK = n_head * d_k
    out_dtype = q.dtype

    wq, bq, wk, bk, wv, bv, wo, bo = params
    assert wq.shape == (D, HDK) and wo.shape == (HDK, D)

    scale = 1.0 / math.sqrt(d_k)

    # --- Weights: bf16, head-major, 1/sqrt(d_k) folded into the Q projection ---
    wq_h = (wq * scale).reshape(D, n_head, d_k).transpose(1, 0, 2).astype(jnp.bfloat16)
    bq_h = (bq[0] * scale).reshape(n_head, 1, d_k).astype(jnp.float32)
    wo_h = wo.reshape(n_head, d_k, D).astype(jnp.bfloat16)
    bo2 = bo.astype(jnp.float32)

    # --- K/V projections hoisted out of the kernel (one batched bf16 matmul) ---
    # Stored head-major (B*H, Skv, d_k) bf16 so every per-head access inside the
    # kernel is a lane-aligned leading-axis index.
    def proj_heads(x, w, b):
        y = jnp.dot(x.astype(jnp.bfloat16), w.astype(jnp.bfloat16),
                    preferred_element_type=jnp.float32) + b[0]
        y = y.reshape(B, -1, n_head, d_k).transpose(0, 2, 1, 3)    # (B, H, Skv, d_k)
        return y.reshape(B * n_head, -1, d_k).astype(jnp.bfloat16)

    kp = proj_heads(k, wk, bk)
    vp = proj_heads(v, wv, bv)
    q_bf = q.astype(jnp.bfloat16)

    if exp_in_bf16 is None:
        exp_in_bf16 = _bf16_eup_available()
    exp_dtype = jnp.bfloat16 if exp_in_bf16 else jnp.float32

    vmem_cap = _vmem_capacity_bytes()
    if q_tile is None:
        q_tile = _pick_q_tile(Sq, Skv, vmem_capacity=vmem_cap)
    assert Sq % q_tile == 0, "q_tile must divide the query sequence length"
    nq = Sq // q_tile

    est = _estimate_vmem_bytes(q_tile, Skv, D, n_head, d_k,
                               single_buffer_weights=single_buffer_weights,
                               exp_bytes=2 if exp_in_bf16 else 4)
    if vmem_limit_bytes is None and est > 12 * 1024 * 1024:
        # Raise the scoped limit only when the default would be tight; never above
        # ~85% of this generation's physical VMEM (64 MiB on v7x, 128 MiB v5e/v6e).
        vmem_limit_bytes = min(max(int(est * 1.5), 32 * 1024 * 1024),
                               int(0.85 * vmem_cap))

    kernel = functools.partial(_mha_kernel, n_head=n_head, exp_dtype=exp_dtype)

    def const_spec(shape):
        # Constant-index operands (weights/biases) never change blocks; request
        # single buffering to halve their resident VMEM footprint.
        idx = lambda b, i: (0,) * len(shape)
        if single_buffer_weights:
            return pl.BlockSpec(shape, idx, pipeline_mode=pl.Buffered(1))
        return pl.BlockSpec(shape, idx)

    q_spec = pl.BlockSpec((1, q_tile, D), lambda b, i: (b, i, 0))
    kv_spec = pl.BlockSpec((n_head, Skv, d_k), lambda b, i: (b, 0, 0))
    out_spec = pl.BlockSpec((1, q_tile, D), lambda b, i: (b, i, 0))

    return pl.pallas_call(
        kernel,
        out_shape=jax.ShapeDtypeStruct((B, Sq, D), out_dtype),
        grid_spec=pltpu.PrefetchScalarGridSpec(
            num_scalar_prefetch=0,
            grid=(B, nq),
            in_specs=[q_spec, kv_spec, kv_spec,
                      const_spec((n_head, D, d_k)),     # wq (head-major, scaled)
                      const_spec((n_head, 1, d_k)),     # bq (scaled)
                      const_spec((n_head, d_k, D)),     # wo (head-major)
                      const_spec((1, D))],              # bo
            out_specs=out_spec),
        compiler_params=pltpu.CompilerParams(
            # No carried scratch any more: both grid axes are independent, so both
            # can be parallel (uses both TensorCores on v7x even when B is small).
            dimension_semantics=("parallel", "parallel"),
            vmem_limit_bytes=vmem_limit_bytes),
    )(q_bf, kp, vp, wq_h, bq_h, wo_h, bo2)


# -------------------------------- reference -----------------------------------

def _reference(q, k, v, params, *, n_head: int, d_k: int):
    """Pure-JAX f32 reference mirroring the PyTorch module (eval mode, mask=None)."""
    wq, bq, wk, bk, wv, bv, wo, bo = params
    B, Sq, D = q.shape

    def proj(x, w, b):
        y = x @ w + b[0]                       # (B, S, H*d_k)
        y = y.reshape(B, -1, n_head, d_k)
        return jnp.transpose(y, (0, 2, 1, 3))  # (B, H, S, d_k)

    qh, kh, vh = proj(q, wq, bq), proj(k, wk, bk), proj(v, wv, bv)
    scores = jnp.einsum("bhqd,bhkd->bhqk", qh, kh) / math.sqrt(d_k)
    attn = jax.nn.softmax(scores, axis=-1)
    x = jnp.einsum("bhqk,bhkd->bhqd", attn, vh)
    x = jnp.transpose(x, (0, 2, 1, 3)).reshape(B, Sq, n_head * d_k)
    return x @ wo + bo[0]


# ----------------------------------- main --------------------------------------

if __name__ == "__main__":
    # Small shapes consistent with the module: d_model = n_head * d_k.
    B, S, n_head, d_k = 2, 8, 4, 8
    d_model = n_head * d_k  # 32

    key = jax.random.PRNGKey(0)
    keys = jax.random.split(key, 12)

    q = jax.random.normal(keys[0], (B, S, d_model), dtype=jnp.float32)
    k = jax.random.normal(keys[1], (B, S, d_model), dtype=jnp.float32)
    v = jax.random.normal(keys[2], (B, S, d_model), dtype=jnp.float32)

    # Deterministic parameter init (Linear weights stored as (in, out); biases (1, out)).
    def init_linear(kw, kb, fan_in, fan_out):
        bound = 1.0 / math.sqrt(fan_in)
        w = jax.random.uniform(kw, (fan_in, fan_out), jnp.float32, -bound, bound)
        b = jax.random.uniform(kb, (1, fan_out), jnp.float32, -bound, bound)
        return w, b

    wq, bq = init_linear(keys[3], keys[4], d_model, n_head * d_k)
    wk, bk = init_linear(keys[5], keys[6], d_model, n_head * d_k)
    wv, bv = init_linear(keys[7], keys[8], d_model, n_head * d_k)
    wo, bo = init_linear(keys[9], keys[10], n_head * d_k, d_model)
    params = (wq, bq, wk, bk, wv, bv, wo, bo)

    ref = _reference(q, k, v, params, n_head=n_head, d_k=d_k)

    def run_and_check(conservative: bool):
        out = multi_head_attention(
            q, k, v, params, n_head=n_head, d_k=d_k,
            single_buffer_weights=not conservative,
            exp_in_bf16=False if conservative else None)
        out = jax.block_until_ready(out)
        assert out.shape == (B, S, d_model)
        # Tolerance relaxed vs a pure-f32 kernel: all matmuls feed bf16 operands to
        # the MXU (f32 accumulation), the K/V projections are cached in bf16, and
        # the softmax uses the approx EUP reciprocal (and bf16 exp on v6e/v7x).
        assert jnp.allclose(out, ref, atol=5e-2, rtol=5e-2), \
            "Pallas kernel mismatch vs reference"
        return out

    try:
        out = run_and_check(conservative=False)
    except Exception:
        # Conservative fallback: default (double) buffering for the constant-index
        # weight blocks and f32 softmax exp, in case this JAX/Mosaic build or TPU
        # generation rejects pipeline_mode=pl.Buffered(1) or bf16 transcendentals.
        out = run_and_check(conservative=True)

    print("KERNEL_OK")
</pallas_src>

<mosaic_0001>
module attributes {stable_mosaic.version = 11 : i64} {
  func.func @_mha_kernel(%arg0: i32, %arg1: i32, %arg2: memref<1x8x32xbf16, #tpu.memory_space<vmem>>, %arg3: memref<4x8x8xbf16, #tpu.memory_space<vmem>>, %arg4: memref<4x8x8xbf16, #tpu.memory_space<vmem>>, %arg5: memref<4x32x8xbf16, #tpu.memory_space<vmem>>, %arg6: memref<4x1x8xf32, #tpu.memory_space<vmem>>, %arg7: memref<4x8x32xbf16, #tpu.memory_space<vmem>>, %arg8: memref<1x32xf32, #tpu.memory_space<vmem>>, %arg9: memref<1x8x32xf32, #tpu.memory_space<vmem>>) attributes {dimension_semantics = [#tpu.dimension_semantics<parallel>, #tpu.dimension_semantics<parallel>], iteration_bounds = array<i64: 2, 1>, scalar_prefetch = 0 : i64, scratch_operands = 0 : i64, tpu.core_type = #tpu.core_type<tc>, window_params = [{transform_indices = @transform_0, window_bounds = array<i64: 1, 8, 32>}, {transform_indices = @transform_1, window_bounds = array<i64: 4, 8, 8>}, {transform_indices = @transform_2, window_bounds = array<i64: 4, 8, 8>}, {pipeline_mode = #tpu.pipeline_mode<synchronous>, transform_indices = @transform_3, window_bounds = array<i64: 4, 32, 8>}, {pipeline_mode = #tpu.pipeline_mode<synchronous>, transform_indices = @transform_4, window_bounds = array<i64: 4, 1, 8>}, {pipeline_mode = #tpu.pipeline_mode<synchronous>, transform_indices = @transform_5, window_bounds = array<i64: 4, 8, 32>}, {pipeline_mode = #tpu.pipeline_mode<synchronous>, transform_indices = @transform_6, window_bounds = array<i64: 1, 32>}, {transform_indices = @transform_7, window_bounds = array<i64: 1, 8, 32>}]} {
    %c0 = arith.constant 0 : index
    %c0_0 = arith.constant 0 : index
    %c0_1 = arith.constant 0 : index
    %0 = vector.load %arg2[%c0, %c0_0, %c0_1] : memref<1x8x32xbf16, #tpu.memory_space<vmem>>, vector<1x8x32xbf16>
    %1 = vector.shape_cast %0 : vector<1x8x32xbf16> to vector<8x32xbf16>
    %cst = arith.constant 0.000000e+00 : f32
    %2 = vector.broadcast %cst : f32 to vector<8x32xf32>
    %c0_i32 = arith.constant 0 : i32
    %c4_i32 = arith.constant 4 : i32
    %3 = arith.addi %c0_i32, %c4_i32 : i32
    %c1_i32 = arith.constant 1 : i32
    %4 = scf.for %arg10 = %c0_i32 to %3 step %c1_i32 iter_args(%arg11 = %2) -> (vector<8x32xf32>)  : i32 {
      %11 = arith.index_cast %arg10 : i32 to index
      %c0_8 = arith.constant 0 : index
      %c0_9 = arith.constant 0 : index
      %12 = vector.load %arg5[%11, %c0_8, %c0_9] : memref<4x32x8xbf16, #tpu.memory_space<vmem>>, vector<1x32x8xbf16>
      %13 = vector.shape_cast %12 : vector<1x32x8xbf16> to vector<32x8xbf16>
      %cst_10 = arith.constant dense<0.000000e+00> : vector<8x8xf32>
      %14 = tpu.matmul %1, %13, %cst_10 {dimension_numbers = #tpu.dot_dimension_numbers<[1], [0], [0], [1], [0, 0, 1, 1], [], []>} : vector<8x32xbf16>, vector<32x8xbf16>, vector<8x8xf32> -> vector<8x8xf32>
      %15 = arith.index_cast %arg10 : i32 to index
      %c0_11 = arith.constant 0 : index
      %c0_12 = arith.constant 0 : index
      %16 = vector.load %arg6[%15, %c0_11, %c0_12] : memref<4x1x8xf32, #tpu.memory_space<vmem>>, vector<1x1x8xf32>
      %17 = vector.shape_cast %16 : vector<1x1x8xf32> to vector<1x8xf32>
      %18 = vector.broadcast %17 : vector<1x8xf32> to vector<8x8xf32>
      %19 = arith.addf %14, %18 : vector<8x8xf32>
      %20 = arith.truncf %19 : vector<8x8xf32> to vector<8x8xbf16>
      %21 = arith.index_cast %arg10 : i32 to index
      %c0_13 = arith.constant 0 : index
      %c0_14 = arith.constant 0 : index
      %22 = vector.load %arg3[%21, %c0_13, %c0_14] : memref<4x8x8xbf16, #tpu.memory_space<vmem>>, vector<1x8x8xbf16>
      %23 = vector.shape_cast %22 : vector<1x8x8xbf16> to vector<8x8xbf16>
      %24 = arith.index_cast %arg10 : i32 to index
      %c0_15 = arith.constant 0 : index
      %c0_16 = arith.constant 0 : index
      %25 = vector.load %arg4[%24, %c0_15, %c0_16] : memref<4x8x8xbf16, #tpu.memory_space<vmem>>, vector<1x8x8xbf16>
      %26 = vector.shape_cast %25 : vector<1x8x8xbf16> to vector<8x8xbf16>
      %cst_17 = arith.constant dense<0.000000e+00> : vector<8x8xf32>
      %27 = tpu.matmul %20, %23, %cst_17 {dimension_numbers = #tpu.dot_dimension_numbers<[1], [1], [0], [0], [0, 0, 1, 0], [], []>} : vector<8x8xbf16>, vector<8x8xbf16>, vector<8x8xf32> -> vector<8x8xf32>
      %cst_18 = arith.constant dense<0xFF800000> : vector<8xf32>
      %28 = vector.multi_reduction <maximumf>, %27, %cst_18 [1] : vector<8x8xf32> to vector<8xf32>
      %29 = vector.shape_cast %28 : vector<8xf32> to vector<8x1xf32>
      %30 = vector.broadcast %29 : vector<8x1xf32> to vector<8x8xf32>
      %31 = arith.subf %27, %30 : vector<8x8xf32>
      %32 = math.exp %31 : vector<8x8xf32>
      %cst_19 = arith.constant dense<0.000000e+00> : vector<8xf32>
      %33 = vector.multi_reduction <add>, %32, %cst_19 [1] : vector<8x8xf32> to vector<8xf32>
      %34 = vector.shape_cast %33 : vector<8xf32> to vector<8x1xf32>
      %35 = tpu.reciprocal %34 {approx = true} : vector<8x1xf32> -> vector<8x1xf32>
      %36 = arith.truncf %32 : vector<8x8xf32> to vector<8x8xbf16>
      %cst_20 = arith.constant dense<0.000000e+00> : vector<8x8xf32>
      %37 = tpu.matmul %36, %26, %cst_20 {dimension_numbers = #tpu.dot_dimension_numbers<[1], [0], [0], [1], [0, 0, 1, 1], [], []>} : vector<8x8xbf16>, vector<8x8xbf16>, vector<8x8xf32> -> vector<8x8xf32>
      %38 = vector.broadcast %35 : vector<8x1xf32> to vector<8x8xf32>
      %39 = arith.mulf %37, %38 : vector<8x8xf32>
      %40 = arith.truncf %39 : vector<8x8xf32> to vector<8x8xbf16>
      %41 = arith.index_cast %arg10 : i32 to index
      %c0_21 = arith.constant 0 : index
      %c0_22 = arith.constant 0 : index
      %42 = vector.load %arg7[%41, %c0_21, %c0_22] : memref<4x8x32xbf16, #tpu.memory_space<vmem>>, vector<1x8x32xbf16>
      %43 = vector.shape_cast %42 : vector<1x8x32xbf16> to vector<8x32xbf16>
      %cst_23 = arith.constant dense<0.000000e+00> : vector<8x32xf32>
      %44 = tpu.matmul %40, %43, %cst_23 {dimension_numbers = #tpu.dot_dimension_numbers<[1], [0], [0], [1], [0, 0, 1, 1], [], []>} : vector<8x8xbf16>, vector<8x32xbf16>, vector<8x32xf32> -> vector<8x32xf32>
      %45 = arith.addf %arg11, %44 : vector<8x32xf32>
      scf.yield %45 : vector<8x32xf32>
    }
    %c4_i32_2 = arith.constant 4 : i32
    %c0_3 = arith.constant 0 : index
    %c0_4 = arith.constant 0 : index
    %5 = vector.load %arg8[%c0_3, %c0_4] : memref<1x32xf32, #tpu.memory_space<vmem>>, vector<1x32xf32>
    %6 = vector.broadcast %5 : vector<1x32xf32> to vector<8x32xf32>
    %7 = arith.addf %4, %6 : vector<8x32xf32>
    %c0_5 = arith.constant 0 : index
    %c0_6 = arith.constant 0 : index
    %c0_7 = arith.constant 0 : index
    %8 = vector.load %arg9[%c0_5, %c0_6, %c0_7] : memref<1x8x32xf32, #tpu.memory_space<vmem>>, vector<1x8x32xf32>
    %9 = vector.shape_cast %8 : vector<1x8x32xf32> to vector<8x32xf32>
    %10 = vector.shape_cast %7 : vector<8x32xf32> to vector<1x8x32xf32>
    tpu.vector_store %arg9[%c0_5, %c0_6, %c0_7], %10 {strides = array<i32>} : memref<1x8x32xf32, #tpu.memory_space<vmem>>, vector<1x8x32xf32>,
    return
  }
  func.func @transform_0(%arg0: i32, %arg1: i32) -> (i32, i32, i32) {
    %c0_i32 = arith.constant 0 : i32
    %c0_i32_0 = arith.constant 0 : i32
    return %arg0, %arg1, %c0_i32 : i32, i32, i32
  }
  func.func @transform_1(%arg0: i32, %arg1: i32) -> (i32, i32, i32) {
    %c0_i32 = arith.constant 0 : i32
    %c0_i32_0 = arith.constant 0 : i32
    %c0_i32_1 = arith.constant 0 : i32
    return %arg0, %c0_i32, %c0_i32_0 : i32, i32, i32
  }
  func.func @transform_2(%arg0: i32, %arg1: i32) -> (i32, i32, i32) {
    %c0_i32 = arith.constant 0 : i32
    %c0_i32_0 = arith.constant 0 : i32
    %c0_i32_1 = arith.constant 0 : i32
    return %arg0, %c0_i32, %c0_i32_0 : i32, i32, i32
  }
  func.func @transform_3(%arg0: i32, %arg1: i32) -> (i32, i32, i32) {
    %c0_i32 = arith.constant 0 : i32
    %c0_i32_0 = arith.constant 0 : i32
    %c0_i32_1 = arith.constant 0 : i32
    %c0_i32_2 = arith.constant 0 : i32
    return %c0_i32, %c0_i32_0, %c0_i32_1 : i32, i32, i32
  }
  func.func @transform_4(%arg0: i32, %arg1: i32) -> (i32, i32, i32) {
    %c0_i32 = arith.constant 0 : i32
    %c0_i32_0 = arith.constant 0 : i32
    %c0_i32_1 = arith.constant 0 : i32
    %c0_i32_2 = arith.constant 0 : i32
    return %c0_i32, %c0_i32_0, %c0_i32_1 : i32, i32, i32
  }
  func.func @transform_5(%arg0: i32, %arg1: i32) -> (i32, i32, i32) {
    %c0_i32 = arith.constant 0 : i32
    %c0_i32_0 = arith.constant 0 : i32
    %c0_i32_1 = arith.constant 0 : i32
    %c0_i32_2 = arith.constant 0 : i32
    return %c0_i32, %c0_i32_0, %c0_i32_1 : i32, i32, i32
  }
  func.func @transform_6(%arg0: i32, %arg1: i32) -> (i32, i32) {
    %c0_i32 = arith.constant 0 : i32
    %c0_i32_0 = arith.constant 0 : i32
    %c0_i32_1 = arith.constant 0 : i32
    return %c0_i32, %c0_i32_0 : i32, i32
  }
  func.func @transform_7(%arg0: i32, %arg1: i32) -> (i32, i32, i32) {
    %c0_i32 = arith.constant 0 : i32
    %c0_i32_0 = arith.constant 0 : i32
    return %arg0, %arg1, %c0_i32 : i32, i32, i32
  }
}

module attributes {stable_mosaic.version = 11 : i64} {
  func.func @_mha_kernel(%arg0: i32, %arg1: i32, %arg2: memref<1x8x32xbf16, #tpu.memory_space<vmem>>, %arg3: memref<4x8x8xbf16, #tpu.memory_space<vmem>>, %arg4: memref<4x8x8xbf16, #tpu.memory_space<vmem>>, %arg5: memref<4x32x8xbf16, #tpu.memory_space<vmem>>, %arg6: memref<4x1x8xf32, #tpu.memory_space<vmem>>, %arg7: memref<4x8x32xbf16, #tpu.memory_space<vmem>>, %arg8: memref<1x32xf32, #tpu.memory_space<vmem>>, %arg9: memref<1x8x32xf32, #tpu.memory_space<vmem>>) attributes {dimension_semantics = [#tpu.dimension_semantics<parallel>, #tpu.dimension_semantics<parallel>], iteration_bounds = array<i64: 2, 1>, scalar_prefetch = 0 : i64, scratch_operands = 0 : i64, tpu.core_type = #tpu.core_type<tc>, window_params = [{transform_indices = @transform_0, window_bounds = array<i64: 1, 8, 32>}, {transform_indices = @transform_1, window_bounds = array<i64: 4, 8, 8>}, {transform_indices = @transform_2, window_bounds = array<i64: 4, 8, 8>}, {pipeline_mode = #tpu.pipeline_mode<synchronous>, transform_indices = @transform_3, window_bounds = array<i64: 4, 32, 8>}, {pipeline_mode = #tpu.pipeline_mode<synchronous>, transform_indices = @transform_4, window_bounds = array<i64: 4, 1, 8>}, {pipeline_mode = #tpu.pipeline_mode<synchronous>, transform_indices = @transform_5, window_bounds = array<i64: 4, 8, 32>}, {pipeline_mode = #tpu.pipeline_mode<synchronous>, transform_indices = @transform_6, window_bounds = array<i64: 1, 32>}, {transform_indices = @transform_7, window_bounds = array<i64: 1, 8, 32>}]} {
    %c0 = arith.constant 0 : index
    %c0_0 = arith.constant 0 : index
    %c0_1 = arith.constant 0 : index
    %0 = vector.load %arg2[%c0, %c0_0, %c0_1] : memref<1x8x32xbf16, #tpu.memory_space<vmem>>, vector<1x8x32xbf16>
    %1 = vector.shape_cast %0 : vector<1x8x32xbf16> to vector<8x32xbf16>
    %cst = arith.constant 0.000000e+00 : f32
    %2 = vector.broadcast %cst : f32 to vector<8x32xf32>
    %c0_i32 = arith.constant 0 : i32
    %c4_i32 = arith.constant 4 : i32
    %3 = arith.addi %c0_i32, %c4_i32 : i32
    %c1_i32 = arith.constant 1 : i32
    %4 = scf.for %arg10 = %c0_i32 to %3 step %c1_i32 iter_args(%arg11 = %2) -> (vector<8x32xf32>)  : i32 {
      %11 = arith.index_cast %arg10 : i32 to index
      %c0_8 = arith.constant 0 : index
      %c0_9 = arith.constant 0 : index
      %12 = vector.load %arg5[%11, %c0_8, %c0_9] : memref<4x32x8xbf16, #tpu.memory_space<vmem>>, vector<1x32x8xbf16>
      %13 = vector.shape_cast %12 : vector<1x32x8xbf16> to vector<32x8xbf16>
      %cst_10 = arith.constant dense<0.000000e+00> : vector<8x8xf32>
      %14 = tpu.matmul %1, %13, %cst_10 {dimension_numbers = #tpu.dot_dimension_numbers<[1], [0], [0], [1], [0, 0, 1, 1], [], []>} : vector<8x32xbf16>, vector<32x8xbf16>, vector<8x8xf32> -> vector<8x8xf32>
      %15 = arith.index_cast %arg10 : i32 to index
      %c0_11 = arith.constant 0 : index
      %c0_12 = arith.constant 0 : index
      %16 = vector.load %arg6[%15, %c0_11, %c0_12] : memref<4x1x8xf32, #tpu.memory_space<vmem>>, vector<1x1x8xf32>
      %17 = vector.shape_cast %16 : vector<1x1x8xf32> to vector<1x8xf32>
      %18 = vector.broadcast %17 : vector<1x8xf32> to vector<8x8xf32>
      %19 = arith.addf %14, %18 : vector<8x8xf32>
      %20 = arith.truncf %19 : vector<8x8xf32> to vector<8x8xbf16>
      %21 = arith.index_cast %arg10 : i32 to index
      %c0_13 = arith.constant 0 : index
      %c0_14 = arith.constant 0 : index
      %22 = vector.load %arg3[%21, %c0_13, %c0_14] : memref<4x8x8xbf16, #tpu.memory_space<vmem>>, vector<1x8x8xbf16>
      %23 = vector.shape_cast %22 : vector<1x8x8xbf16> to vector<8x8xbf16>
      %24 = arith.index_cast %arg10 : i32 to index
      %c0_15 = arith.constant 0 : index
      %c0_16 = arith.constant 0 : index
      %25 = vector.load %arg4[%24, %c0_15, %c0_16] : memref<4x8x8xbf16, #tpu.memory_space<vmem>>, vector<1x8x8xbf16>
      %26 = vector.shape_cast %25 : vector<1x8x8xbf16> to vector<8x8xbf16>
      %cst_17 = arith.constant dense<0.000000e+00> : vector<8x8xf32>
      %27 = tpu.matmul %20, %23, %cst_17 {dimension_numbers = #tpu.dot_dimension_numbers<[1], [1], [0], [0], [0, 0, 1, 0], [], []>} : vector<8x8xbf16>, vector<8x8xbf16>, vector<8x8xf32> -> vector<8x8xf32>
      %cst_18 = arith.constant dense<0xFF800000> : vector<8xf32>
      %28 = vector.multi_reduction <maximumf>, %27, %cst_18 [1] : vector<8x8xf32> to vector<8xf32>
      %29 = vector.shape_cast %28 : vector<8xf32> to vector<8x1xf32>
      %30 = vector.broadcast %29 : vector<8x1xf32> to vector<8x8xf32>
      %31 = arith.subf %27, %30 : vector<8x8xf32>
      %32 = math.exp %31 : vector<8x8xf32>
      %cst_19 = arith.constant dense<0.000000e+00> : vector<8xf32>
      %33 = vector.multi_reduction <add>, %32, %cst_19 [1] : vector<8x8xf32> to vector<8xf32>
      %34 = vector.shape_cast %33 : vector<8xf32> to vector<8x1xf32>
      %35 = tpu.reciprocal %34 {approx = true} : vector<8x1xf32> -> vector<8x1xf32>
      %36 = arith.truncf %32 : vector<8x8xf32> to vector<8x8xbf16>
      %cst_20 = arith.constant dense<0.000000e+00> : vector<8x8xf32>
      %37 = tpu.matmul %36, %26, %cst_20 {dimension_numbers = #tpu.dot_dimension_numbers<[1], [0], [0], [1], [0, 0, 1, 1], [], []>} : vector<8x8xbf16>, vector<8x8xbf16>, vector<8x8xf32> -> vector<8x8xf32>
      %38 = vector.broadcast %35 : vector<8x1xf32> to vector<8x8xf32>
      %39 = arith.mulf %37, %38 : vector<8x8xf32>
      %40 = arith.truncf %39 : vector<8x8xf32> to vector<8x8xbf16>
      %41 = arith.index_cast %arg10 : i32 to index
      %c0_21 = arith.constant 0 : index
      %c0_22 = arith.constant 0 : index
      %42 = vector.load %arg7[%41, %c0_21, %c0_22] : memref<4x8x32xbf16, #tpu.memory_space<vmem>>, vector<1x8x32xbf16>
      %43 = vector.shape_cast %42 : vector<1x8x32xbf16> to vector<8x32xbf16>
      %cst_23 = arith.constant dense<0.000000e+00> : vector<8x32xf32>
      %44 = tpu.matmul %40, %43, %cst_23 {dimension_numbers = #tpu.dot_dimension_numbers<[1], [0], [0], [1], [0, 0, 1, 1], [], []>} : vector<8x8xbf16>, vector<8x32xbf16>, vector<8x32xf32> -> vector<8x32xf32>
      %45 = arith.addf %arg11, %44 : vector<8x32xf32>
      scf.yield %45 : vector<8x32xf32>
    }
    %c4_i32_2 = arith.constant 4 : i32
    %c0_3 = arith.constant 0 : index
    %c0_4 = arith.constant 0 : index
    %5 = vector.load %arg8[%c0_3, %c0_4] : memref<1x32xf32, #tpu.memory_space<vmem>>, vector<1x32xf32>
    %6 = vector.broadcast %5 : vector<1x32xf32> to vector<8x32xf32>
    %7 = arith.addf %4, %6 : vector<8x32xf32>
    %c0_5 = arith.constant 0 : index
    %c0_6 = arith.constant 0 : index
    %c0_7 = arith.constant 0 : index
    %8 = vector.load %arg9[%c0_5, %c0_6, %c0_7] : memref<1x8x32xf32, #tpu.memory_space<vmem>>, vector<1x8x32xf32>
    %9 = vector.shape_cast %8 : vector<1x8x32xf32> to vector<8x32xf32>
    %10 = vector.shape_cast %7 : vector<8x32xf32> to vector<1x8x32xf32>
    tpu.vector_store %arg9[%c0_5, %c0_6, %c0_7], %10 {strides = array<i32>} : memref<1x8x32xf32, #tpu.memory_space<vmem>>, vector<1x8x32xf32>,
    return
  }
  func.func @transform_0(%arg0: i32, %arg1: i32) -> (i32, i32, i32) {
    %c0_i32 = arith.constant 0 : i32
    %c0_i32_0 = arith.constant 0 : i32
    return %arg0, %arg1, %c0_i32 : i32, i32, i32
  }
  func.func @transform_1(%arg0: i32, %arg1: i32) -> (i32, i32, i32) {
    %c0_i32 = arith.constant 0 : i32
    %c0_i32_0 = arith.constant 0 : i32
    %c0_i32_1 = arith.constant 0 : i32
    return %arg0, %c0_i32, %c0_i32_0 : i32, i32, i32
  }
  func.func @transform_2(%arg0: i32, %arg1: i32) -> (i32, i32, i32) {
    %c0_i32 = arith.constant 0 : i32
    %c0_i32_0 = arith.constant 0 : i32
    %c0_i32_1 = arith.constant 0 : i32
    return %arg0, %c0_i32, %c0_i32_0 : i32, i32, i32
  }
  func.func @transform_3(%arg0: i32, %arg1: i32) -> (i32, i32, i32) {
    %c0_i32 = arith.constant 0 : i32
    %c0_i32_0 = arith.constant 0 : i32
    %c0_i32_1 = arith.constant 0 : i32
    %c0_i32_2 = arith.constant 0 : i32
    return %c0_i32, %c0_i32_0, %c0_i32_1 : i32, i32, i32
  }
  func.func @transform_4(%arg0: i32, %arg1: i32) -> (i32, i32, i32) {
    %c0_i32 = arith.constant 0 : i32
    %c0_i32_0 = arith.constant 0 : i32
    %c0_i32_1 = arith.constant 0 : i32
    %c0_i32_2 = arith.constant 0 : i32
    return %c0_i32, %c0_i32_0, %c0_i32_1 : i32, i32, i32
  }
  func.func @transform_5(%arg0: i32, %arg1: i32) -> (i32, i32, i32) {
    %c0_i32 = arith.constant 0 : i32
    %c0_i32_0 = arith.constant 0 : i32
    %c0_i32_1 = arith.constant 0 : i32
    %c0_i32_2 = arith.constant 0 : i32
    return %c0_i32, %c0_i32_0, %c0_i32_1 : i32, i32, i32
  }
  func.func @transform_6(%arg0: i32, %arg1: i32) -> (i32, i32) {
    %c0_i32 = arith.constant 0 : i32
    %c0_i32_0 = arith.constant 0 : i32
    %c0_i32_1 = arith.constant 0 : i32
    return %c0_i32, %c0_i32_0 : i32, i32
  }
  func.func @transform_7(%arg0: i32, %arg1: i32) -> (i32, i32, i32) {
    %c0_i32 = arith.constant 0 : i32
    %c0_i32_0 = arith.constant 0 : i32
    return %arg0, %arg1, %c0_i32 : i32, i32, i32
  }
}

</mosaic_0001>

<llo_original>
// kernel: tpu_custom_call.1
$region0: #{tpu_custom_call.1}
  #allocation0 [shape = 'u32[]', space=smem, size = 0x4, offset = 0x4, fixed_abs, tag = 'smem constant byte address 0x4 - core index']
  #allocation1 [shape = 'u32[72,128]{1,0:T(1,128)}', space=vmem, size = 0x9000, scoped, tag = 'internal scratch']
  %s0 = inlined_call_operand.hbm [shape: bf16[2,8,32], index: 0, kind: input, shape index: {}]
  %s1 = inlined_call_operand.vmem [shape: bf16[8,8,8], index: 1, kind: input, shape index: {}]
  %s2 = inlined_call_operand.vmem [shape: bf16[8,8,8], index: 2, kind: input, shape index: {}]
  %s3 = inlined_call_operand.vmem [shape: bf16[4,32,8], index: 3, kind: input, shape index: {}]
  %s4 = inlined_call_operand.hbm [shape: f32[4,1,8], index: 4, kind: input, shape index: {}]
  %s5 = inlined_call_operand.vmem [shape: bf16[4,8,32], index: 5, kind: input, shape index: {}]
  %s6 = inlined_call_operand.vmem [shape: f32[1,32], index: 6, kind: input, shape index: {}]
  %s7 = inlined_call_operand.hbm [shape: f32[2,8,32], index: 7, kind: output, shape index: {}]
  %s8 = sld [smem:[#allocation0]]
  $region76: #{tpu_custom_call.1} parent=0
    _
  %s10 = ssub.s32 1, %s8
  %s11 = scalar_select 0, %s10, %s8
  $region1: #{tpu_custom_call.1} parent=0
    #allocation2 [shape = 'u8[4096]{0}', space=vmem, size = 0x1000, scoped, tag = 'input window, operand 0']
    #allocation3 [shape = 's32[2]{0}', space=sflag, size = 0x8, scoped, tag = 'scoped memory for tpu_custom_call.1']
    #allocation4 [shape = 's32[2]{0}', space=sflag, size = 0x8, scoped, tag = 'scoped memory for tpu_custom_call.1']
    #allocation5 [shape = 'u8[2048]{0}', space=vmem, size = 0x800, scoped, tag = 'input window, operand 4, single buffered']
    #allocation6 [shape = 's32[1]{0}', space=sflag, size = 0x4, scoped, tag = 'scoped memory for tpu_custom_call.1']
    #allocation7 [shape = 'u8[8192]{0}', space=vmem, size = 0x2000, scoped, tag = 'output window, operand 0']
    %12 = vsyncpa [#allocation3], 0
    %s13 = scalar_lea.sflag [#allocation3], 1
    %14 = vsyncpa %s13, 0
    %15 = vsyncpa [#allocation6], 0
    %16 = vsyncpa [#allocation4], 0
    %s17 = scalar_lea.sflag [#allocation4], 1
    %18 = vsyncpa %s17, 0
    loop: start=0, step=1, limit=4
    $region2: #{tpu_custom_call.1} parent=1 // loop_pre_header
      _
    $region3: #{tpu_custom_call.1} parent=1 // loop_header
      %s20 = sphi 0, %s24
      %p21 = scmp.ge.s32.totalorder %s20, 4
      %s27 = sphi 0, %s39
      %s28 = sphi 0, %s35
      %s29 = sphi 0, %s27
      %s30 = sphi 0, %s28
      %s31 = sphi 0, %s29
      %s32 = sphi 0, %s30
      %s44 = sphi 0, %s46
      %s47 = sphi 0, %s44
      %s48 = sphi 0, %s47
      %s64 = sphi 0, %s48
      %s70 = sphi 0, %s72
      %s73 = sphi 0, %s70
      %s74 = sphi 0, %s73
      %s90 = sphi 0, %s74
      %s96 = sphi 0, %s98
      %s99 = sphi 0, %s96
      %s100 = sphi 0, %s99
      %s116 = sphi 0, %s100
      %s120 = sphi 0, %s120
      %s122 = sphi 0, %s120
      %s123 = sphi 0, %s122
      %s137 = sphi 0, %s123
      %s141 = sphi 0, %s141
      %s143 = sphi 0, %s141
      %s144 = sphi 0, %s143
      %s158 = sphi 0, %s144
      %s162 = sphi 0, %s162
      %s164 = sphi 0, %s162
      %s165 = sphi 0, %s164
      %s179 = sphi 0, %s165
      %s183 = sphi 0, %s183
      %s185 = sphi 0, %s183
      %s186 = sphi 0, %s185
      %s200 = sphi 0, %s186
      %s208 = sphi 0, %s210
      %s211 = sphi 0, %s208
      %s212 = sphi 0, %s211
      %s228 = sphi 0, %s212
    $region4: #{tpu_custom_call.1} parent=1 // loop_header_branch
      %23 = sbr.rel (%p21) target = $region8
    $region5: #{tpu_custom_call.1} parent=1 // loop_body
      %s25 = ssub.s32 %s20, 1
      %s26 = ssub.s32 %s20, 2
      %s33 = sadd.s32 1, %s28
      %p34 = scmp.ge.s32.totalorder %s33, 1
      %s35 = scalar_select %p34, 0, %s33
      %s36 = sadd.s32 1, %s27
      %s37 = scalar_select %p34, %s36, %s27
      %p38 = scmp.ge.s32.totalorder %s37, 2
      %s39 = scalar_select %p38, 0, %s37
      %s40 = ssub.s32 %s27, %s39
      %s41 = ssub.s32 %s28, %s35
      %s42 = sor.u32 %s40, %s41
      %p43 = scmp.eq.s32.totalorder %s42, 0
      %s45 = sadd.s32 %s44, 1
      %s46 = scalar_select %p43, %s44, %s45
      %p49 = pneg %p43
      %p50 = scmp.eq.s32.totalorder %s20, 1
      %p51 = por %p49, %p50
      %p52 = scmp.ne.s32.totalorder %s44, %s47
      %p53 = scmp.eq.s32.totalorder %s20, 0
      %p54 = por %p52, %p53
      %p55 = scmp.ne.s32.totalorder %s44, %s47
      %p56 = scmp.eq.s32.totalorder %s25, 1
      %p57 = por %p55, %p56
      %p58 = scmp.ne.s32.totalorder %s47, %s48
      %p59 = scmp.eq.s32.totalorder %s25, 0
      %p60 = por %p58, %p59
      %p61 = scmp.ne.s32.totalorder %s47, %s48
      %p62 = scmp.eq.s32.totalorder %s26, 1
      %p63 = por %p61, %p62
      %p65 = scmp.ne.s32.totalorder %s48, %s64
      %p66 = scmp.eq.s32.totalorder %s26, 0
      %p67 = por %p65, %p66
      %s68 = ssub.s32 %s27, %s39
      %p69 = scmp.eq.s32.totalorder %s68, 0
      %s71 = sadd.s32 %s70, 1
      %s72 = scalar_select %p69, %s70, %s71
      %p75 = pneg %p69
      %p76 = scmp.eq.s32.totalorder %s20, 1
      %p77 = por %p75, %p76
      %p78 = scmp.ne.s32.totalorder %s70, %s73
      %p79 = scmp.eq.s32.totalorder %s20, 0
      %p80 = por %p78, %p79
      %p81 = scmp.ne.s32.totalorder %s70, %s73
      %p82 = scmp.eq.s32.totalorder %s25, 1
      %p83 = por %p81, %p82
      %p84 = scmp.ne.s32.totalorder %s73, %s74
      %p85 = scmp.eq.s32.totalorder %s25, 0
      %p86 = por %p84, %p85
      %p87 = scmp.ne.s32.totalorder %s73, %s74
      %p88 = scmp.eq.s32.totalorder %s26, 1
      %p89 = por %p87, %p88
      %p91 = scmp.ne.s32.totalorder %s74, %s90
      %p92 = scmp.eq.s32.totalorder %s26, 0
      %p93 = por %p91, %p92
      %s94 = ssub.s32 %s27, %s39
      %p95 = scmp.eq.s32.totalorder %s94, 0
      %s97 = sadd.s32 %s96, 1
      %s98 = scalar_select %p95, %s96, %s97
      %p101 = pneg %p95
      %p102 = scmp.eq.s32.totalorder %s20, 1
      %p103 = por %p101, %p102
      %p104 = scmp.ne.s32.totalorder %s96, %s99
      %p105 = scmp.eq.s32.totalorder %s20, 0
      %p106 = por %p104, %p105
      %p107 = scmp.ne.s32.totalorder %s96, %s99
      %p108 = scmp.eq.s32.totalorder %s25, 1
      %p109 = por %p107, %p108
      %p110 = scmp.ne.s32.totalorder %s99, %s100
      %p111 = scmp.eq.s32.totalorder %s25, 0
      %p112 = por %p110, %p111
      %p113 = scmp.ne.s32.totalorder %s99, %s100
      %p114 = scmp.eq.s32.totalorder %s26, 1
      %p115 = por %p113, %p114
      %p117 = scmp.ne.s32.totalorder %s100, %s116
      %p118 = scmp.eq.s32.totalorder %s26, 0
      %p119 = por %p117, %p118
      %s121 = sadd.s32 %s120, 1
      %p124 = scmp.eq.s32.totalorder %s20, 1
      %p125 = scmp.ne.s32.totalorder %s120, %s122
      %p126 = scmp.eq.s32.totalorder %s20, 0
      %p127 = por %p125, %p126
      %p128 = scmp.ne.s32.totalorder %s120, %s122
      %p129 = scmp.eq.s32.totalorder %s25, 1
      %p130 = por %p128, %p129
      %p131 = scmp.ne.s32.totalorder %s122, %s123
      %p132 = scmp.eq.s32.totalorder %s25, 0
      %p133 = por %p131, %p132
      %p134 = scmp.ne.s32.totalorder %s122, %s123
      %p135 = scmp.eq.s32.totalorder %s26, 1
      %p136 = por %p134, %p135
      %p138 = scmp.ne.s32.totalorder %s123, %s137
      %p139 = scmp.eq.s32.totalorder %s26, 0
      %p140 = por %p138, %p139
      %s142 = sadd.s32 %s141, 1
      %p145 = scmp.eq.s32.totalorder %s20, 1
      %p146 = scmp.ne.s32.totalorder %s141, %s143
      %p147 = scmp.eq.s32.totalorder %s20, 0
      %p148 = por %p146, %p147
      %p149 = scmp.ne.s32.totalorder %s141, %s143
      %p150 = scmp.eq.s32.totalorder %s25, 1
      %p151 = por %p149, %p150
      %p152 = scmp.ne.s32.totalorder %s143, %s144
      %p153 = scmp.eq.s32.totalorder %s25, 0
      %p154 = por %p152, %p153
      %p155 = scmp.ne.s32.totalorder %s143, %s144
      %p156 = scmp.eq.s32.totalorder %s26, 1
      %p157 = por %p155, %p156
      %p159 = scmp.ne.s32.totalorder %s144, %s158
      %p160 = scmp.eq.s32.totalorder %s26, 0
      %p161 = por %p159, %p160
      %s163 = sadd.s32 %s162, 1
      %p166 = scmp.eq.s32.totalorder %s20, 1
      %p167 = scmp.ne.s32.totalorder %s162, %s164
      %p168 = scmp.eq.s32.totalorder %s20, 0
      %p169 = por %p167, %p168
      %p170 = scmp.ne.s32.totalorder %s162, %s164
      %p171 = scmp.eq.s32.totalorder %s25, 1
      %p172 = por %p170, %p171
      %p173 = scmp.ne.s32.totalorder %s164, %s165
      %p174 = scmp.eq.s32.totalorder %s25, 0
      %p175 = por %p173, %p174
      %p176 = scmp.ne.s32.totalorder %s164, %s165
      %p177 = scmp.eq.s32.totalorder %s26, 1
      %p178 = por %p176, %p177
      %p180 = scmp.ne.s32.totalorder %s165, %s179
      %p181 = scmp.eq.s32.totalorder %s26, 0
      %p182 = por %p180, %p181
      %s184 = sadd.s32 %s183, 1
      %p187 = scmp.eq.s32.totalorder %s20, 1
      %p188 = scmp.ne.s32.totalorder %s183, %s185
      %p189 = scmp.eq.s32.totalorder %s20, 0
      %p190 = por %p188, %p189
      %p191 = scmp.ne.s32.totalorder %s183, %s185
      %p192 = scmp.eq.s32.totalorder %s25, 1
      %p193 = por %p191, %p192
      %p194 = scmp.ne.s32.totalorder %s185, %s186
      %p195 = scmp.eq.s32.totalorder %s25, 0
      %p196 = por %p194, %p195
      %p197 = scmp.ne.s32.totalorder %s185, %s186
      %p198 = scmp.eq.s32.totalorder %s26, 1
      %p199 = por %p197, %p198
      %p201 = scmp.ne.s32.totalorder %s186, %s200
      %p202 = scmp.eq.s32.totalorder %s26, 0
      %p203 = por %p201, %p202
      %s204 = ssub.s32 %s27, %s39
      %s205 = ssub.s32 %s28, %s35
      %s206 = sor.u32 %s204, %s205
      %p207 = scmp.eq.s32.totalorder %s206, 0
      %s209 = sadd.s32 %s208, 1
      %s210 = scalar_select %p207, %s208, %s209
      %p213 = pneg %p207
      %p214 = scmp.eq.s32.totalorder %s20, 1
      %p215 = por %p213, %p214
      %p216 = scmp.ne.s32.totalorder %s208, %s211
      %p217 = scmp.eq.s32.totalorder %s20, 0
      %p218 = por %p216, %p217
      %p219 = scmp.ne.s32.totalorder %s208, %s211
      %p220 = scmp.eq.s32.totalorder %s25, 1
      %p221 = por %p219, %p220
      %p222 = scmp.ne.s32.totalorder %s211, %s212
      %p223 = scmp.eq.s32.totalorder %s25, 0
      %p224 = por %p222, %p223
      %p225 = scmp.ne.s32.totalorder %s211, %s212
      %p226 = scmp.eq.s32.totalorder %s26, 1
      %p227 = por %p225, %p226
      %p229 = scmp.ne.s32.totalorder %s212, %s228
      %p230 = scmp.eq.s32.totalorder %s26, 0
      %p231 = por %p229, %p230
      %p232 = scmp.le.s32.totalorder 1, %s20
      %p233 = scmp.lt.s32.totalorder %s20, 3
      %p234 = pnand %p232, %p233
      %p235 = pneg %p234
      // Predicated region
      $region9: #{tpu_custom_call.1} parent=5 // pred_check
        _
      $region10: #{tpu_custom_call.1} parent=5 // pred_check_branch
        %237 = sbr.rel (%p234) target = $region12
      $region11: #{tpu_custom_call.1} parent=5 // pred_region
        %s238 = ssub.s32 %s20, 1
        // Predicated region
        $region13: #{tpu_custom_call.1} parent=11 // pred_check
          %p239 = pneg %p133
        $region14: #{tpu_custom_call.1} parent=11 // pred_check_branch
          %241 = sbr.rel (%p239) target = $region16
        $region15: #{tpu_custom_call.1} parent=11 // pred_region
          _
        $region16: #{tpu_custom_call.1} parent=11 // pred_fallthru
          _
        // Predicated region
        $region17: #{tpu_custom_call.1} parent=11 // pred_check
          %p242 = pneg %p154
        $region18: #{tpu_custom_call.1} parent=11 // pred_check_branch
          %244 = sbr.rel (%p242) target = $region20
        $region19: #{tpu_custom_call.1} parent=11 // pred_region
          %246 = vsyncadd [#allocation6], 0
          %s247 = sshll.u32 %s4, 4
          %s248 = int_to_ptr.hbm [resolvable:$true] %s247
          %s249 = sshll.u32 [#allocation5], 4
          %s250 = int_to_ptr.vmem [resolvable:$true] %s249
          %255 = dma.hbm_to_vmem [thread:$0]  %s248, 64, %s250, [#allocation6], 16, 16, 1
        $region20: #{tpu_custom_call.1} parent=11 // pred_fallthru
          _
        // Predicated region
        $region21: #{tpu_custom_call.1} parent=11 // pred_check
          %p256 = pneg %p175
        $region22: #{tpu_custom_call.1} parent=11 // pred_check_branch
          %258 = sbr.rel (%p256) target = $region24
        $region23: #{tpu_custom_call.1} parent=11 // pred_region
          _
        $region24: #{tpu_custom_call.1} parent=11 // pred_fallthru
          _
        // Predicated region
        $region25: #{tpu_custom_call.1} parent=11 // pred_check
          %p259 = pneg %p196
        $region26: #{tpu_custom_call.1} parent=11 // pred_check_branch
          %261 = sbr.rel (%p259) target = $region28
        $region27: #{tpu_custom_call.1} parent=11 // pred_region
          _
        $region28: #{tpu_custom_call.1} parent=11 // pred_fallthru
          _
      $region12: #{tpu_custom_call.1} parent=5 // pred_fallthru
        _
      %p262 = scmp.lt.s32.totalorder %s20, 2
      // Predicated region
      $region29: #{tpu_custom_call.1} parent=5 // pred_check
        %p263 = pneg %p262
      $region30: #{tpu_custom_call.1} parent=5 // pred_check_branch
        %265 = sbr.rel (%p263) target = $region32
      $region31: #{tpu_custom_call.1} parent=5 // pred_region
        // Predicated region
        $region33: #{tpu_custom_call.1} parent=31 // pred_check
          %p266 = pneg %p54
        $region34: #{tpu_custom_call.1} parent=31 // pred_check_branch
          %268 = sbr.rel (%p266) target = $region36
        $region35: #{tpu_custom_call.1} parent=31 // pred_region
          %s269 = sand.u32 %s44, 1
          %s270 = scalar_lea.sflag [#allocation3], %s269
          %s271 = sand.u32 %s44, 1
          %s272 = smul.addr %s271, 4
          %s273 = scalar_lea.vmem [#allocation2], %s272
          %275 = vsyncadd %s270, 0
          %s276 = sadd.s32 %s28, %s27
          %s277 = smul.addr %s276, 4
          %s278 = scalar_lea.hbm %s0, %s277
          %s280 = sshll.u32 %s278, 4
          %s281 = int_to_ptr.hbm [resolvable:$true] %s280
          %s282 = sshll.u32 %s273, 4
          %s283 = int_to_ptr.vmem [resolvable:$true] %s282
          %285 = dma.hbm_to_vmem [thread:$0]  %s281, 64, %s283, %s270
        $region36: #{tpu_custom_call.1} parent=31 // pred_fallthru
          _
        // Predicated region
        $region37: #{tpu_custom_call.1} parent=31 // pred_check
          %p286 = pneg %p80
        $region38: #{tpu_custom_call.1} parent=31 // pred_check_branch
          %288 = sbr.rel (%p286) target = $region40
        $region39: #{tpu_custom_call.1} parent=31 // pred_region
          %s289 = smul.u32 4, %s27
          %p290 = scmp.lt.s32.totalorder %s289, 7
          %s291 = scalar_select %p290, %s289, 7
          %s292 = smul.addr %s291, 4
          %s293 = scalar_lea.vmem %s1, %s292
          %s294 = smul.u32 4, %s27
        $region40: #{tpu_custom_call.1} parent=31 // pred_fallthru
          _
        // Predicated region
        $region41: #{tpu_custom_call.1} parent=31 // pred_check
          %p295 = pneg %p106
        $region42: #{tpu_custom_call.1} parent=31 // pred_check_branch
          %297 = sbr.rel (%p295) target = $region44
        $region43: #{tpu_custom_call.1} parent=31 // pred_region
          %s298 = smul.u32 4, %s27
          %p299 = scmp.lt.s32.totalorder %s298, 7
          %s300 = scalar_select %p299, %s298, 7
          %s301 = smul.addr %s300, 4
          %s302 = scalar_lea.vmem %s2, %s301
          %s303 = smul.u32 4, %s27
        $region44: #{tpu_custom_call.1} parent=31 // pred_fallthru
          _
      $region32: #{tpu_custom_call.1} parent=5 // pred_fallthru
        _
      %p304 = scmp.le.s32.totalorder 1, %s20
      %p305 = scmp.lt.s32.totalorder %s20, 3
      %p306 = pnand %p304, %p305
      %p307 = pneg %p306
      // Predicated region
      $region45: #{tpu_custom_call.1} parent=5 // pred_check
        _
      $region46: #{tpu_custom_call.1} parent=5 // pred_check_branch
        %309 = sbr.rel (%p306) target = $region48
      $region47: #{tpu_custom_call.1} parent=5 // pred_region
        %s310 = ssub.s32 %s20, 1
        %s311 = sand.u32 %s47, 1
        %s312 = scalar_lea.sflag [#allocation3], %s311
        %s313 = sand.u32 %s47, 1
        %s314 = smul.addr %s313, 4
        %s315 = scalar_lea.vmem [#allocation2], %s314
        // Predicated region
        $region49: #{tpu_custom_call.1} parent=47 // pred_check
          %p316 = pneg %p60
        $region50: #{tpu_custom_call.1} parent=47 // pred_check_branch
          %318 = sbr.rel (%p316) target = $region52
        $region51: #{tpu_custom_call.1} parent=47 // pred_region
          %320 = dma.done %s312, 64
        $region52: #{tpu_custom_call.1} parent=47 // pred_fallthru
          _
        // Predicated region
        $region53: #{tpu_custom_call.1} parent=47 // pred_check
          %p321 = pneg %p154
        $region54: #{tpu_custom_call.1} parent=47 // pred_check_branch
          %323 = sbr.rel (%p321) target = $region56
        $region55: #{tpu_custom_call.1} parent=47 // pred_region
          %325 = dma.done [#allocation6], 64
        $region56: #{tpu_custom_call.1} parent=47 // pred_fallthru
          _
        %s326 = sand.u32 %s47, 1
        %s327 = scalar_lea.sflag [#allocation3], %s326
        %s328 = sand.u32 %s47, 1
        %s329 = smul.addr %s328, 4
        %s330 = scalar_lea.vmem [#allocation2], %s329
        %p331 = pneg %p60
        %p332 = pneg %p57
        %s333 = smul.u32 4, %s29
        %p334 = scmp.lt.s32.totalorder %s333, 7
        %s335 = scalar_select %p334, %s333, 7
        %s336 = smul.addr %s335, 4
        %s337 = scalar_lea.vmem %s1, %s336
        %p338 = pneg %p86
        %p339 = pneg %p83
        %s340 = smul.u32 4, %s29
        %p341 = scmp.lt.s32.totalorder %s340, 7
        %s342 = scalar_select %p341, %s340, 7
        %s343 = smul.addr %s342, 4
        %s344 = scalar_lea.vmem %s2, %s343
        %p345 = pneg %p112
        %p346 = pneg %p109
        %p347 = pneg %p133
        %p348 = pneg %p130
        %p349 = pneg %p154
        %p350 = pneg %p151
        %p351 = pneg %p175
        %p352 = pneg %p172
        %p353 = pneg %p196
        %p354 = pneg %p193
        %p355 = pneg %p224
        %p356 = pneg %p221
        %s357 = sand.u32 %s211, 1
        %s358 = scalar_lea.sflag [#allocation4], %s357
        %s359 = sand.u32 %s211, 1
        %s360 = smul.addr %s359, 8
        %s361 = scalar_lea.vmem [#allocation7], %s360
        %s362 = smul.u32 4, %s29
        %p363 = scmp.lt.s32.totalorder %s362, 7
        %s364 = scalar_select %p363, %s362, 7
        %s365 = smul.addr %s364, 4
        %s366 = scalar_lea.vmem %s1, %s365
        %s367 = smul.u32 4, %s29
        %s368 = smul.u32 4, %s29
        %p369 = scmp.lt.s32.totalorder %s368, 7
        %s370 = scalar_select %p369, %s368, 7
        %s371 = smul.addr %s370, 4
        %s372 = scalar_lea.vmem %s2, %s371
        %s373 = smul.u32 4, %s29
        %v375 = vld [vmem:[%s315] sm:$0xf]
        loop: start=0, step=1, limit=4
        $region57: #{tpu_custom_call.1} parent=47 // loop_pre_header
          _
        $region58: #{tpu_custom_call.1} parent=47 // loop_header
          %s377 = sphi 0, %s381
          %p378 = scmp.ge.s32.totalorder %s377, 4
          %v382 = vphi 0.0, %v506
        $region59: #{tpu_custom_call.1} parent=47 // loop_header_branch
          %380 = sbr.rel (%p378) target = $region63
        $region60: #{tpu_custom_call.1} parent=47 // loop_body
          %s383 = smul.u32 %s377, 4
          %s384 = smul.addr %s383, 4
          %s385 = scalar_lea.vmem %s3, %s384
          %v386 = vld [vmem:[%s385] sm:$0xf]
          %v387 = vld [vmem:[%s385 + $0x4] sm:$0xf]
          %v388 = vld [vmem:[%s385 + $0x8] sm:$0xf]
          %v389 = vld [vmem:[%s385 + $0xc] sm:$0xf]
          %s390 = scalar_lea.vmem [#allocation5], %s377
          %v391 = vld [vmem:[%s390] sm:$0x1]
          %v393 = vperm.slane %v391, 0
          %v399 = vunpack.c.l.b16 %v386
          %v400 = vunpack.c.l.b16 %v387
          %v401 = vunpack.c.l.b16 %v388
          %v402 = vunpack.c.l.b16 %v389
          %v403 = vpack.c.b16 %v400, %v399
          %v404 = vpack.c.b16 %v402, %v401
          %vm407 = vcmask 261120
          %v409 = vsel %vm407, %v375, 0
          %411 = vmatpush.bf16.msra.mxu0 0
          %412 = vmatpush.bf16.msra.mxu0 0
          %413 = vmatpush.bf16.msra.mxu0 0
          %414 = vmatpush.bf16.msra.mxu0 0
          %415 = vmatpush.bf16.msra.mxu0 0
          %416 = vmatpush.bf16.msra.mxu0 0
          %417 = vmatpush.bf16.msra.mxu0 %v404
          %418 = vmatpush.bf16.msra.mxu0 %v403
          %419 = vmatmul.bf16.gmra.mxu0 %v409
          %v420 = vpop.f32.mrf.mxu0
          %v421 = vadd.f32 %v393, %v420
          %v422 = vpop.f32.mrf.mxu0
          %423 = vdwg.mxu0
          %v424 = vpack.c.bf16 %v421, %v421
          %s425 = smul.addr %s377, 4
          %s426 = scalar_lea.vmem %s366, %s425
          %v427 = vld [vmem:[%s426] sm:$0xf]
          %s428 = smul.addr %s377, 4
          %s429 = scalar_lea.vmem %s372, %s428
          %v430 = vld [vmem:[%s429] sm:$0xf]
          %vm431 = vcmask 64512
          %v433 = vsel %vm431, %v424, 0
          %v436 = vsel %vm431, %v427, 0
          %438 = vmatpush.bf16.xpose.msra.mxu0 0
          %439 = vmatpush.bf16.xpose.msra.mxu0 0
          %440 = vmatpush.bf16.xpose.msra.mxu0 0
          %441 = vmatpush.bf16.xpose.msra.mxu0 0
          %442 = vmatpush.bf16.xpose.msra.mxu0 0
          %443 = vmatpush.bf16.xpose.msra.mxu0 0
          %444 = vmatpush.bf16.xpose.msra.mxu0 0
          %445 = vmatpush.bf16.xpose.msra.mxu0 %v436
          %446 = vmatmul.bf16.gmra.mxu0 %v433
          %v447 = vpop.f32.mrf.mxu0
          %v448 = vadd.f32 0.0, %v447
          %v449 = vpop.f32.mrf.mxu0
          %450 = vdwg.mxu0
          %v451 = vsel %vm431, %v448, -inf
          %452 = vmax.xlane.f32.xlu0 %v451
          %v453 = vpop.xlane.xlu0 %452
          %v454 = vsub.f32 %v448, %v453
          %v455 = vmul.f32 %v454, 1.442695
          %v456 = vpow.pop %v455
          %v457 = vsel %vm431, %v456, 0.0
          %458 = vadd.xlane.f32.xlu0 %v457
          %v459 = vpop.xlane.xlu0 %458
          %v460 = vrcp.pop %v459
          %v461 = vpack.c.bf16 %v456, %v456
          %v463 = vsel %vm431, %v461, 0
          %vm465 = vcmask 1043456
          %v467 = vsel %vm465, %v430, 0
          %469 = vmatpush.bf16.msra.mxu0 0
          %470 = vmatpush.bf16.msra.mxu0 0
          %471 = vmatpush.bf16.msra.mxu0 0
          %472 = vmatpush.bf16.msra.mxu0 0
          %473 = vmatpush.bf16.msra.mxu0 0
          %474 = vmatpush.bf16.msra.mxu0 0
          %475 = vmatpush.bf16.msra.mxu0 0
          %476 = vmatpush.bf16.msra.mxu0 %v467
          %477 = vmatmul.bf16.gmra.mxu0 %v463
          %v478 = vpop.f32.mrf.mxu0
          %v479 = vadd.f32 0.0, %v478
          %v480 = vpop.f32.mrf.mxu0
          %481 = vdwg.mxu0
          %v482 = vmul.f32 %v479, %v460
          %v483 = vpack.c.bf16 %v482, %v482
          %s484 = smul.addr %s377, 4
          %s485 = scalar_lea.vmem %s5, %s484
          %v486 = vld [vmem:[%s485] sm:$0xf]
          %v488 = vsel %vm431, %v483, 0
          %v491 = vsel %vm465, %v486, 0
          %493 = vmatpush.bf16.msra.mxu0 0
          %494 = vmatpush.bf16.msra.mxu0 0
          %495 = vmatpush.bf16.msra.mxu0 0
          %496 = vmatpush.bf16.msra.mxu0 0
          %497 = vmatpush.bf16.msra.mxu0 0
          %498 = vmatpush.bf16.msra.mxu0 0
          %499 = vmatpush.bf16.msra.mxu0 0
          %500 = vmatpush.bf16.msra.mxu0 %v491
          %501 = vmatmul.bf16.gmra.mxu0 %v488
          %v502 = vpop.f32.mrf.mxu0
          %v503 = vadd.f32 0.0, %v502
          %v504 = vpop.f32.mrf.mxu0
          %505 = vdwg.mxu0
          %v506 = vadd.f32 %v382, %v503
        $region61: #{tpu_custom_call.1} parent=47 // loop_footer
          %s381 = sadd.s32 1, %s377
        $region62: #{tpu_custom_call.1} parent=47 // loop_footer_branch
          %376 = sbr.rel target = $region58
        $region63: #{tpu_custom_call.1} parent=47 // loop_exit
          _
        %v507 = vld [vmem:[%s6] sm:$0x1]
        %v509 = vperm.slane %v507, 0
        %v511 = vadd.f32 %v382, %v509
        %vm512 = vcmask 261120
        %513 = vst.msk [vmem:[%s361] sm:$0xff] %vm512, %v511
        %s514 = sand.u32 %s211, 1
        %s515 = scalar_lea.sflag [#allocation4], %s514
        %s516 = sand.u32 %s211, 1
        %s517 = smul.addr %s516, 8
        %s518 = scalar_lea.vmem [#allocation7], %s517
        // Predicated region
        $region64: #{tpu_custom_call.1} parent=47 // pred_check
          %p519 = pneg %p221
        $region65: #{tpu_custom_call.1} parent=47 // pred_check_branch
          %521 = sbr.rel (%p519) target = $region67
        $region66: #{tpu_custom_call.1} parent=47 // pred_region
          %523 = vsyncadd %s515, 0
          %s524 = sadd.s32 %s30, %s29
          %s525 = smul.addr %s524, 8
          %s526 = scalar_lea.hbm %s7, %s525
          %s528 = sshll.u32 %s518, 4
          %s529 = int_to_ptr.vmem [resolvable:$true] %s528
          %s530 = sshll.u32 %s526, 4
          %s531 = int_to_ptr.hbm [resolvable:$true] %s530
          %533 = dma.vmem_to_hbm [thread:$0]  %s529, 128, %s531, %s515
        $region67: #{tpu_custom_call.1} parent=47 // pred_fallthru
          _
      $region48: #{tpu_custom_call.1} parent=5 // pred_fallthru
        _
      %p534 = scmp.le.s32.totalorder 2, %s20
      // Predicated region
      $region68: #{tpu_custom_call.1} parent=5 // pred_check
        %p535 = pneg %p534
      $region69: #{tpu_custom_call.1} parent=5 // pred_check_branch
        %537 = sbr.rel (%p535) target = $region71
      $region70: #{tpu_custom_call.1} parent=5 // pred_region
        %s538 = ssub.s32 %s20, 2
        // Predicated region
        $region72: #{tpu_custom_call.1} parent=70 // pred_check
          %p539 = pneg %p227
        $region73: #{tpu_custom_call.1} parent=70 // pred_check_branch
          %541 = sbr.rel (%p539) target = $region75
        $region74: #{tpu_custom_call.1} parent=70 // pred_region
          %s542 = sand.u32 %s212, 1
          %s543 = scalar_lea.sflag [#allocation4], %s542
          %s544 = sand.u32 %s212, 1
          %s545 = smul.addr %s544, 8
          %s546 = scalar_lea.vmem [#allocation7], %s545
          %548 = dma.done %s543, 128
        $region75: #{tpu_custom_call.1} parent=70 // pred_fallthru
          _
      $region71: #{tpu_custom_call.1} parent=5 // pred_fallthru
        _
    $region6: #{tpu_custom_call.1} parent=1 // loop_footer
      %s24 = sadd.s32 1, %s20
    $region7: #{tpu_custom_call.1} parent=1 // loop_footer_branch
      %19 = sbr.rel target = $region3
    $region8: #{tpu_custom_call.1} parent=1 // loop_exit
      _
    %549 = vsyncpa [#allocation3], 1
    %s550 = scalar_lea.sflag [#allocation3], 1
    %551 = vsyncpa %s550, 1
    %552 = vsyncpa [#allocation6], 1
    %553 = vsyncpa [#allocation4], 1
    %s554 = scalar_lea.sflag [#allocation4], 1
    %555 = vsyncpa %s554, 1

// kernel: tpu_custom_call.1
$region0: #{tpu_custom_call.1}
  #allocation0 [shape = 'u32[]', space=smem, size = 0x4, offset = 0x4, fixed_abs, tag = 'smem constant byte address 0x4 - core index']
  #allocation1 [shape = 'u32[72,128]{1,0:T(1,128)}', space=vmem, size = 0x9000, scoped, tag = 'internal scratch']
  %s0 = inlined_call_operand.hbm [shape: bf16[2,8,32], index: 0, kind: input, shape index: {}]
  %s1 = inlined_call_operand.vmem [shape: bf16[8,8,8], index: 1, kind: input, shape index: {}]
  %s2 = inlined_call_operand.vmem [shape: bf16[8,8,8], index: 2, kind: input, shape index: {}]
  %s3 = inlined_call_operand.vmem [shape: bf16[4,32,8], index: 3, kind: input, shape index: {}]
  %s4 = inlined_call_operand.hbm [shape: f32[4,1,8], index: 4, kind: input, shape index: {}]
  %s5 = inlined_call_operand.vmem [shape: bf16[4,8,32], index: 5, kind: input, shape index: {}]
  %s6 = inlined_call_operand.vmem [shape: f32[1,32], index: 6, kind: input, shape index: {}]
  %s7 = inlined_call_operand.hbm [shape: f32[2,8,32], index: 7, kind: output, shape index: {}]
  %s8 = sld [smem:[#allocation0]]
  $region76: #{tpu_custom_call.1} parent=0
    _
  %s10 = ssub.s32 1, %s8
  %s11 = scalar_select 0, %s10, %s8
  $region1: #{tpu_custom_call.1} parent=0
    #allocation2 [shape = 'u8[4096]{0}', space=vmem, size = 0x1000, scoped, tag = 'input window, operand 0']
    #allocation3 [shape = 's32[2]{0}', space=sflag, size = 0x8, scoped, tag = 'scoped memory for tpu_custom_call.1']
    #allocation4 [shape = 's32[2]{0}', space=sflag, size = 0x8, scoped, tag = 'scoped memory for tpu_custom_call.1']
    #allocation5 [shape = 'u8[2048]{0}', space=vmem, size = 0x800, scoped, tag = 'input window, operand 4, single buffered']
    #allocation6 [shape = 's32[1]{0}', space=sflag, size = 0x4, scoped, tag = 'scoped memory for tpu_custom_call.1']
    #allocation7 [shape = 'u8[8192]{0}', space=vmem, size = 0x2000, scoped, tag = 'output window, operand 0']
    %12 = vsyncpa [#allocation3], 0
    %s13 = scalar_lea.sflag [#allocation3], 1
    %14 = vsyncpa %s13, 0
    %15 = vsyncpa [#allocation6], 0
    %16 = vsyncpa [#allocation4], 0
    %s17 = scalar_lea.sflag [#allocation4], 1
    %18 = vsyncpa %s17, 0
    loop: start=0, step=1, limit=4
    $region2: #{tpu_custom_call.1} parent=1 // loop_pre_header
      _
    $region3: #{tpu_custom_call.1} parent=1 // loop_header
      %s20 = sphi 0, %s24
      %p21 = scmp.ge.s32.totalorder %s20, 4
      %s27 = sphi 0, %s39
      %s28 = sphi 0, %s35
      %s29 = sphi 0, %s27
      %s30 = sphi 0, %s28
      %s31 = sphi 0, %s29
      %s32 = sphi 0, %s30
      %s44 = sphi 0, %s46
      %s47 = sphi 0, %s44
      %s48 = sphi 0, %s47
      %s64 = sphi 0, %s48
      %s70 = sphi 0, %s72
      %s73 = sphi 0, %s70
      %s74 = sphi 0, %s73
      %s90 = sphi 0, %s74
      %s96 = sphi 0, %s98
      %s99 = sphi 0, %s96
      %s100 = sphi 0, %s99
      %s116 = sphi 0, %s100
      %s120 = sphi 0, %s120
      %s122 = sphi 0, %s120
      %s123 = sphi 0, %s122
      %s137 = sphi 0, %s123
      %s141 = sphi 0, %s141
      %s143 = sphi 0, %s141
      %s144 = sphi 0, %s143
      %s158 = sphi 0, %s144
      %s162 = sphi 0, %s162
      %s164 = sphi 0, %s162
      %s165 = sphi 0, %s164
      %s179 = sphi 0, %s165
      %s183 = sphi 0, %s183
      %s185 = sphi 0, %s183
      %s186 = sphi 0, %s185
      %s200 = sphi 0, %s186
      %s208 = sphi 0, %s210
      %s211 = sphi 0, %s208
      %s212 = sphi 0, %s211
      %s228 = sphi 0, %s212
    $region4: #{tpu_custom_call.1} parent=1 // loop_header_branch
      %23 = sbr.rel (%p21) target = $region8
    $region5: #{tpu_custom_call.1} parent=1 // loop_body
      %s25 = ssub.s32 %s20, 1
      %s26 = ssub.s32 %s20, 2
      %s33 = sadd.s32 1, %s28
      %p34 = scmp.ge.s32.totalorder %s33, 1
      %s35 = scalar_select %p34, 0, %s33
      %s36 = sadd.s32 1, %s27
      %s37 = scalar_select %p34, %s36, %s27
      %p38 = scmp.ge.s32.totalorder %s37, 2
      %s39 = scalar_select %p38, 0, %s37
      %s40 = ssub.s32 %s27, %s39
      %s41 = ssub.s32 %s28, %s35
      %s42 = sor.u32 %s40, %s41
      %p43 = scmp.eq.s32.totalorder %s42, 0
      %s45 = sadd.s32 %s44, 1
      %s46 = scalar_select %p43, %s44, %s45
      %p49 = pneg %p43
      %p50 = scmp.eq.s32.totalorder %s20, 1
      %p51 = por %p49, %p50
      %p52 = scmp.ne.s32.totalorder %s44, %s47
      %p53 = scmp.eq.s32.totalorder %s20, 0
      %p54 = por %p52, %p53
      %p55 = scmp.ne.s32.totalorder %s44, %s47
      %p56 = scmp.eq.s32.totalorder %s25, 1
      %p57 = por %p55, %p56
      %p58 = scmp.ne.s32.totalorder %s47, %s48
      %p59 = scmp.eq.s32.totalorder %s25, 0
      %p60 = por %p58, %p59
      %p61 = scmp.ne.s32.totalorder %s47, %s48
      %p62 = scmp.eq.s32.totalorder %s26, 1
      %p63 = por %p61, %p62
      %p65 = scmp.ne.s32.totalorder %s48, %s64
      %p66 = scmp.eq.s32.totalorder %s26, 0
      %p67 = por %p65, %p66
      %s68 = ssub.s32 %s27, %s39
      %p69 = scmp.eq.s32.totalorder %s68, 0
      %s71 = sadd.s32 %s70, 1
      %s72 = scalar_select %p69, %s70, %s71
      %p75 = pneg %p69
      %p76 = scmp.eq.s32.totalorder %s20, 1
      %p77 = por %p75, %p76
      %p78 = scmp.ne.s32.totalorder %s70, %s73
      %p79 = scmp.eq.s32.totalorder %s20, 0
      %p80 = por %p78, %p79
      %p81 = scmp.ne.s32.totalorder %s70, %s73
      %p82 = scmp.eq.s32.totalorder %s25, 1
      %p83 = por %p81, %p82
      %p84 = scmp.ne.s32.totalorder %s73, %s74
      %p85 = scmp.eq.s32.totalorder %s25, 0
      %p86 = por %p84, %p85
      %p87 = scmp.ne.s32.totalorder %s73, %s74
      %p88 = scmp.eq.s32.totalorder %s26, 1
      %p89 = por %p87, %p88
      %p91 = scmp.ne.s32.totalorder %s74, %s90
      %p92 = scmp.eq.s32.totalorder %s26, 0
      %p93 = por %p91, %p92
      %s94 = ssub.s32 %s27, %s39
      %p95 = scmp.eq.s32.totalorder %s94, 0
      %s97 = sadd.s32 %s96, 1
      %s98 = scalar_select %p95, %s96, %s97
      %p101 = pneg %p95
      %p102 = scmp.eq.s32.totalorder %s20, 1
      %p103 = por %p101, %p102
      %p104 = scmp.ne.s32.totalorder %s96, %s99
      %p105 = scmp.eq.s32.totalorder %s20, 0
      %p106 = por %p104, %p105
      %p107 = scmp.ne.s32.totalorder %s96, %s99
      %p108 = scmp.eq.s32.totalorder %s25, 1
      %p109 = por %p107, %p108
      %p110 = scmp.ne.s32.totalorder %s99, %s100
      %p111 = scmp.eq.s32.totalorder %s25, 0
      %p112 = por %p110, %p111
      %p113 = scmp.ne.s32.totalorder %s99, %s100
      %p114 = scmp.eq.s32.totalorder %s26, 1
      %p115 = por %p113, %p114
      %p117 = scmp.ne.s32.totalorder %s100, %s116
      %p118 = scmp.eq.s32.totalorder %s26, 0
      %p119 = por %p117, %p118
      %s121 = sadd.s32 %s120, 1
      %p124 = scmp.eq.s32.totalorder %s20, 1
      %p125 = scmp.ne.s32.totalorder %s120, %s122
      %p126 = scmp.eq.s32.totalorder %s20, 0
      %p127 = por %p125, %p126
      %p128 = scmp.ne.s32.totalorder %s120, %s122
      %p129 = scmp.eq.s32.totalorder %s25, 1
      %p130 = por %p128, %p129
      %p131 = scmp.ne.s32.totalorder %s122, %s123
      %p132 = scmp.eq.s32.totalorder %s25, 0
      %p133 = por %p131, %p132
      %p134 = scmp.ne.s32.totalorder %s122, %s123
      %p135 = scmp.eq.s32.totalorder %s26, 1
      %p136 = por %p134, %p135
      %p138 = scmp.ne.s32.totalorder %s123, %s137
      %p139 = scmp.eq.s32.totalorder %s26, 0
      %p140 = por %p138, %p139
      %s142 = sadd.s32 %s141, 1
      %p145 = scmp.eq.s32.totalorder %s20, 1
      %p146 = scmp.ne.s32.totalorder %s141, %s143
      %p147 = scmp.eq.s32.totalorder %s20, 0
      %p148 = por %p146, %p147
      %p149 = scmp.ne.s32.totalorder %s141, %s143
      %p150 = scmp.eq.s32.totalorder %s25, 1
      %p151 = por %p149, %p150
      %p152 = scmp.ne.s32.totalorder %s143, %s144
      %p153 = scmp.eq.s32.totalorder %s25, 0
      %p154 = por %p152, %p153
      %p155 = scmp.ne.s32.totalorder %s143, %s144
      %p156 = scmp.eq.s32.totalorder %s26, 1
      %p157 = por %p155, %p156
      %p159 = scmp.ne.s32.totalorder %s144, %s158
      %p160 = scmp.eq.s32.totalorder %s26, 0
      %p161 = por %p159, %p160
      %s163 = sadd.s32 %s162, 1
      %p166 = scmp.eq.s32.totalorder %s20, 1
      %p167 = scmp.ne.s32.totalorder %s162, %s164
      %p168 = scmp.eq.s32.totalorder %s20, 0
      %p169 = por %p167, %p168
      %p170 = scmp.ne.s32.totalorder %s162, %s164
      %p171 = scmp.eq.s32.totalorder %s25, 1
      %p172 = por %p170, %p171
      %p173 = scmp.ne.s32.totalorder %s164, %s165
      %p174 = scmp.eq.s32.totalorder %s25, 0
      %p175 = por %p173, %p174
      %p176 = scmp.ne.s32.totalorder %s164, %s165
      %p177 = scmp.eq.s32.totalorder %s26, 1
      %p178 = por %p176, %p177
      %p180 = scmp.ne.s32.totalorder %s165, %s179
      %p181 = scmp.eq.s32.totalorder %s26, 0
      %p182 = por %p180, %p181
      %s184 = sadd.s32 %s183, 1
      %p187 = scmp.eq.s32.totalorder %s20, 1
      %p188 = scmp.ne.s32.totalorder %s183, %s185
      %p189 = scmp.eq.s32.totalorder %s20, 0
      %p190 = por %p188, %p189
      %p191 = scmp.ne.s32.totalorder %s183, %s185
      %p192 = scmp.eq.s32.totalorder %s25, 1
      %p193 = por %p191, %p192
      %p194 = scmp.ne.s32.totalorder %s185, %s186
      %p195 = scmp.eq.s32.totalorder %s25, 0
      %p196 = por %p194, %p195
      %p197 = scmp.ne.s32.totalorder %s185, %s186
      %p198 = scmp.eq.s32.totalorder %s26, 1
      %p199 = por %p197, %p198
      %p201 = scmp.ne.s32.totalorder %s186, %s200
      %p202 = scmp.eq.s32.totalorder %s26, 0
      %p203 = por %p201, %p202
      %s204 = ssub.s32 %s27, %s39
      %s205 = ssub.s32 %s28, %s35
      %s206 = sor.u32 %s204, %s205
      %p207 = scmp.eq.s32.totalorder %s206, 0
      %s209 = sadd.s32 %s208, 1
      %s210 = scalar_select %p207, %s208, %s209
      %p213 = pneg %p207
      %p214 = scmp.eq.s32.totalorder %s20, 1
      %p215 = por %p213, %p214
      %p216 = scmp.ne.s32.totalorder %s208, %s211
      %p217 = scmp.eq.s32.totalorder %s20, 0
      %p218 = por %p216, %p217
      %p219 = scmp.ne.s32.totalorder %s208, %s211
      %p220 = scmp.eq.s32.totalorder %s25, 1
      %p221 = por %p219, %p220
      %p222 = scmp.ne.s32.totalorder %s211, %s212
      %p223 = scmp.eq.s32.totalorder %s25, 0
      %p224 = por %p222, %p223
      %p225 = scmp.ne.s32.totalorder %s211, %s212
      %p226 = scmp.eq.s32.totalorder %s26, 1
      %p227 = por %p225, %p226
      %p229 = scmp.ne.s32.totalorder %s212, %s228
      %p230 = scmp.eq.s32.totalorder %s26, 0
      %p231 = por %p229, %p230
      %p232 = scmp.le.s32.totalorder 1, %s20
      %p233 = scmp.lt.s32.totalorder %s20, 3
      %p234 = pnand %p232, %p233
      %p235 = pneg %p234
      // Predicated region
      $region9: #{tpu_custom_call.1} parent=5 // pred_check
        _
      $region10: #{tpu_custom_call.1} parent=5 // pred_check_branch
        %237 = sbr.rel (%p234) target = $region12
      $region11: #{tpu_custom_call.1} parent=5 // pred_region
        %s238 = ssub.s32 %s20, 1
        // Predicated region
        $region13: #{tpu_custom_call.1} parent=11 // pred_check
          %p239 = pneg %p133
        $region14: #{tpu_custom_call.1} parent=11 // pred_check_branch
          %241 = sbr.rel (%p239) target = $region16
        $region15: #{tpu_custom_call.1} parent=11 // pred_region
          _
        $region16: #{tpu_custom_call.1} parent=11 // pred_fallthru
          _
        // Predicated region
        $region17: #{tpu_custom_call.1} parent=11 // pred_check
          %p242 = pneg %p154
        $region18: #{tpu_custom_call.1} parent=11 // pred_check_branch
          %244 = sbr.rel (%p242) target = $region20
        $region19: #{tpu_custom_call.1} parent=11 // pred_region
          %246 = vsyncadd [#allocation6], 0
          %s247 = sshll.u32 %s4, 4
          %s248 = int_to_ptr.hbm [resolvable:$true] %s247
          %s249 = sshll.u32 [#allocation5], 4
          %s250 = int_to_ptr.vmem [resolvable:$true] %s249
          %255 = dma.hbm_to_vmem [thread:$0]  %s248, 64, %s250, [#allocation6], 16, 16, 1
        $region20: #{tpu_custom_call.1} parent=11 // pred_fallthru
          _
        // Predicated region
        $region21: #{tpu_custom_call.1} parent=11 // pred_check
          %p256 = pneg %p175
        $region22: #{tpu_custom_call.1} parent=11 // pred_check_branch
          %258 = sbr.rel (%p256) target = $region24
        $region23: #{tpu_custom_call.1} parent=11 // pred_region
          _
        $region24: #{tpu_custom_call.1} parent=11 // pred_fallthru
          _
        // Predicated region
        $region25: #{tpu_custom_call.1} parent=11 // pred_check
          %p259 = pneg %p196
        $region26: #{tpu_custom_call.1} parent=11 // pred_check_branch
          %261 = sbr.rel (%p259) target = $region28
        $region27: #{tpu_custom_call.1} parent=11 // pred_region
          _
        $region28: #{tpu_custom_call.1} parent=11 // pred_fallthru
          _
      $region12: #{tpu_custom_call.1} parent=5 // pred_fallthru
        _
      %p262 = scmp.lt.s32.totalorder %s20, 2
      // Predicated region
      $region29: #{tpu_custom_call.1} parent=5 // pred_check
        %p263 = pneg %p262
      $region30: #{tpu_custom_call.1} parent=5 // pred_check_branch
        %265 = sbr.rel (%p263) target = $region32
      $region31: #{tpu_custom_call.1} parent=5 // pred_region
        // Predicated region
        $region33: #{tpu_custom_call.1} parent=31 // pred_check
          %p266 = pneg %p54
        $region34: #{tpu_custom_call.1} parent=31 // pred_check_branch
          %268 = sbr.rel (%p266) target = $region36
        $region35: #{tpu_custom_call.1} parent=31 // pred_region
          %s269 = sand.u32 %s44, 1
          %s270 = scalar_lea.sflag [#allocation3], %s269
          %s271 = sand.u32 %s44, 1
          %s272 = smul.addr %s271, 4
          %s273 = scalar_lea.vmem [#allocation2], %s272
          %275 = vsyncadd %s270, 0
          %s276 = sadd.s32 %s28, %s27
          %s277 = smul.addr %s276, 4
          %s278 = scalar_lea.hbm %s0, %s277
          %s280 = sshll.u32 %s278, 4
          %s281 = int_to_ptr.hbm [resolvable:$true] %s280
          %s282 = sshll.u32 %s273, 4
          %s283 = int_to_ptr.vmem [resolvable:$true] %s282
          %285 = dma.hbm_to_vmem [thread:$0]  %s281, 64, %s283, %s270
        $region36: #{tpu_custom_call.1} parent=31 // pred_fallthru
          _
        // Predicated region
        $region37: #{tpu_custom_call.1} parent=31 // pred_check
          %p286 = pneg %p80
        $region38: #{tpu_custom_call.1} parent=31 // pred_check_branch
          %288 = sbr.rel (%p286) target = $region40
        $region39: #{tpu_custom_call.1} parent=31 // pred_region
          %s289 = smul.u32 4, %s27
          %p290 = scmp.lt.s32.totalorder %s289, 7
          %s291 = scalar_select %p290, %s289, 7
          %s292 = smul.addr %s291, 4
          %s293 = scalar_lea.vmem %s1, %s292
          %s294 = smul.u32 4, %s27
        $region40: #{tpu_custom_call.1} parent=31 // pred_fallthru
          _
        // Predicated region
        $region41: #{tpu_custom_call.1} parent=31 // pred_check
          %p295 = pneg %p106
        $region42: #{tpu_custom_call.1} parent=31 // pred_check_branch
          %297 = sbr.rel (%p295) target = $region44
        $region43: #{tpu_custom_call.1} parent=31 // pred_region
          %s298 = smul.u32 4, %s27
          %p299 = scmp.lt.s32.totalorder %s298, 7
          %s300 = scalar_select %p299, %s298, 7
          %s301 = smul.addr %s300, 4
          %s302 = scalar_lea.vmem %s2, %s301
          %s303 = smul.u32 4, %s27
        $region44: #{tpu_custom_call.1} parent=31 // pred_fallthru
          _
      $region32: #{tpu_custom_call.1} parent=5 // pred_fallthru
        _
      %p304 = scmp.le.s32.totalorder 1, %s20
      %p305 = scmp.lt.s32.totalorder %s20, 3
      %p306 = pnand %p304, %p305
      %p307 = pneg %p306
      // Predicated region
      $region45: #{tpu_custom_call.1} parent=5 // pred_check
        _
      $region46: #{tpu_custom_call.1} parent=5 // pred_check_branch
        %309 = sbr.rel (%p306) target = $region48
      $region47: #{tpu_custom_call.1} parent=5 // pred_region
        %s310 = ssub.s32 %s20, 1
        %s311 = sand.u32 %s47, 1
        %s312 = scalar_lea.sflag [#allocation3], %s311
        %s313 = sand.u32 %s47, 1
        %s314 = smul.addr %s313, 4
        %s315 = scalar_lea.vmem [#allocation2], %s314
        // Predicated region
        $region49: #{tpu_custom_call.1} parent=47 // pred_check
          %p316 = pneg %p60
        $region50: #{tpu_custom_call.1} parent=47 // pred_check_branch
          %318 = sbr.rel (%p316) target = $region52
        $region51: #{tpu_custom_call.1} parent=47 // pred_region
          %320 = dma.done %s312, 64
        $region52: #{tpu_custom_call.1} parent=47 // pred_fallthru
          _
        // Predicated region
        $region53: #{tpu_custom_call.1} parent=47 // pred_check
          %p321 = pneg %p154
        $region54: #{tpu_custom_call.1} parent=47 // pred_check_branch
          %323 = sbr.rel (%p321) target = $region56
        $region55: #{tpu_custom_call.1} parent=47 // pred_region
          %325 = dma.done [#allocation6], 64
        $region56: #{tpu_custom_call.1} parent=47 // pred_fallthru
          _
        %s326 = sand.u32 %s47, 1
        %s327 = scalar_lea.sflag [#allocation3], %s326
        %s328 = sand.u32 %s47, 1
        %s329 = smul.addr %s328, 4
        %s330 = scalar_lea.vmem [#allocation2], %s329
        %p331 = pneg %p60
        %p332 = pneg %p57
        %s333 = smul.u32 4, %s29
        %p334 = scmp.lt.s32.totalorder %s333, 7
        %s335 = scalar_select %p334, %s333, 7
        %s336 = smul.addr %s335, 4
        %s337 = scalar_lea.vmem %s1, %s336
        %p338 = pneg %p86
        %p339 = pneg %p83
        %s340 = smul.u32 4, %s29
        %p341 = scmp.lt.s32.totalorder %s340, 7
        %s342 = scalar_select %p341, %s340, 7
        %s343 = smul.addr %s342, 4
        %s344 = scalar_lea.vmem %s2, %s343
        %p345 = pneg %p112
        %p346 = pneg %p109
        %p347 = pneg %p133
        %p348 = pneg %p130
        %p349 = pneg %p154
        %p350 = pneg %p151
        %p351 = pneg %p175
        %p352 = pneg %p172
        %p353 = pneg %p196
        %p354 = pneg %p193
        %p355 = pneg %p224
        %p356 = pneg %p221
        %s357 = sand.u32 %s211, 1
        %s358 = scalar_lea.sflag [#allocation4], %s357
        %s359 = sand.u32 %s211, 1
        %s360 = smul.addr %s359, 8
        %s361 = scalar_lea.vmem [#allocation7], %s360
        %s362 = smul.u32 4, %s29
        %p363 = scmp.lt.s32.totalorder %s362, 7
        %s364 = scalar_select %p363, %s362, 7
        %s365 = smul.addr %s364, 4
        %s366 = scalar_lea.vmem %s1, %s365
        %s367 = smul.u32 4, %s29
        %s368 = smul.u32 4, %s29
        %p369 = scmp.lt.s32.totalorder %s368, 7
        %s370 = scalar_select %p369, %s368, 7
        %s371 = smul.addr %s370, 4
        %s372 = scalar_lea.vmem %s2, %s371
        %s373 = smul.u32 4, %s29
        %v375 = vld [vmem:[%s315] sm:$0xf]
        loop: start=0, step=1, limit=4
        $region57: #{tpu_custom_call.1} parent=47 // loop_pre_header
          _
        $region58: #{tpu_custom_call.1} parent=47 // loop_header
          %s377 = sphi 0, %s381
          %p378 = scmp.ge.s32.totalorder %s377, 4
          %v382 = vphi 0.0, %v506
        $region59: #{tpu_custom_call.1} parent=47 // loop_header_branch
          %380 = sbr.rel (%p378) target = $region63
        $region60: #{tpu_custom_call.1} parent=47 // loop_body
          %s383 = smul.u32 %s377, 4
          %s384 = smul.addr %s383, 4
          %s385 = scalar_lea.vmem %s3, %s384
          %v386 = vld [vmem:[%s385] sm:$0xf]
          %v387 = vld [vmem:[%s385 + $0x4] sm:$0xf]
          %v388 = vld [vmem:[%s385 + $0x8] sm:$0xf]
          %v389 = vld [vmem:[%s385 + $0xc] sm:$0xf]
          %s390 = scalar_lea.vmem [#allocation5], %s377
          %v391 = vld [vmem:[%s390] sm:$0x1]
          %v393 = vperm.slane %v391, 0
          %v399 = vunpack.c.l.b16 %v386
          %v400 = vunpack.c.l.b16 %v387
          %v401 = vunpack.c.l.b16 %v388
          %v402 = vunpack.c.l.b16 %v389
          %v403 = vpack.c.b16 %v400, %v399
          %v404 = vpack.c.b16 %v402, %v401
          %vm407 = vcmask 261120
          %v409 = vsel %vm407, %v375, 0
          %411 = vmatpush.bf16.msra.mxu0 0
          %412 = vmatpush.bf16.msra.mxu0 0
          %413 = vmatpush.bf16.msra.mxu0 0
          %414 = vmatpush.bf16.msra.mxu0 0
          %415 = vmatpush.bf16.msra.mxu0 0
          %416 = vmatpush.bf16.msra.mxu0 0
          %417 = vmatpush.bf16.msra.mxu0 %v404
          %418 = vmatpush.bf16.msra.mxu0 %v403
          %419 = vmatmul.bf16.gmra.mxu0 %v409
          %v420 = vpop.f32.mrf.mxu0
          %v421 = vadd.f32 %v393, %v420
          %v422 = vpop.f32.mrf.mxu0
          %423 = vdwg.mxu0
          %v424 = vpack.c.bf16 %v421, %v421
          %s425 = smul.addr %s377, 4
          %s426 = scalar_lea.vmem %s366, %s425
          %v427 = vld [vmem:[%s426] sm:$0xf]
          %s428 = smul.addr %s377, 4
          %s429 = scalar_lea.vmem %s372, %s428
          %v430 = vld [vmem:[%s429] sm:$0xf]
          %vm431 = vcmask 64512
          %v433 = vsel %vm431, %v424, 0
          %v436 = vsel %vm431, %v427, 0
          %438 = vmatpush.bf16.xpose.msra.mxu0 0
          %439 = vmatpush.bf16.xpose.msra.mxu0 0
          %440 = vmatpush.bf16.xpose.msra.mxu0 0
          %441 = vmatpush.bf16.xpose.msra.mxu0 0
          %442 = vmatpush.bf16.xpose.msra.mxu0 0
          %443 = vmatpush.bf16.xpose.msra.mxu0 0
          %444 = vmatpush.bf16.xpose.msra.mxu0 0
          %445 = vmatpush.bf16.xpose.msra.mxu0 %v436
          %446 = vmatmul.bf16.gmra.mxu0 %v433
          %v447 = vpop.f32.mrf.mxu0
          %v448 = vadd.f32 0.0, %v447
          %v449 = vpop.f32.mrf.mxu0
          %450 = vdwg.mxu0
          %v451 = vsel %vm431, %v448, -inf
          %452 = vmax.xlane.f32.xlu0 %v451
          %v453 = vpop.xlane.xlu0 %452
          %v454 = vsub.f32 %v448, %v453
          %v455 = vmul.f32 %v454, 1.442695
          %v456 = vpow.pop %v455
          %v457 = vsel %vm431, %v456, 0.0
          %458 = vadd.xlane.f32.xlu0 %v457
          %v459 = vpop.xlane.xlu0 %458
          %v460 = vrcp.pop %v459
          %v461 = vpack.c.bf16 %v456, %v456
          %v463 = vsel %vm431, %v461, 0
          %vm465 = vcmask 1043456
          %v467 = vsel %vm465, %v430, 0
          %469 = vmatpush.bf16.msra.mxu0 0
          %470 = vmatpush.bf16.msra.mxu0 0
          %471 = vmatpush.bf16.msra.mxu0 0
          %472 = vmatpush.bf16.msra.mxu0 0
          %473 = vmatpush.bf16.msra.mxu0 0
          %474 = vmatpush.bf16.msra.mxu0 0
          %475 = vmatpush.bf16.msra.mxu0 0
          %476 = vmatpush.bf16.msra.mxu0 %v467
          %477 = vmatmul.bf16.gmra.mxu0 %v463
          %v478 = vpop.f32.mrf.mxu0
          %v479 = vadd.f32 0.0, %v478
          %v480 = vpop.f32.mrf.mxu0
          %481 = vdwg.mxu0
          %v482 = vmul.f32 %v479, %v460
          %v483 = vpack.c.bf16 %v482, %v482
          %s484 = smul.addr %s377, 4
          %s485 = scalar_lea.vmem %s5, %s484
          %v486 = vld [vmem:[%s485] sm:$0xf]
          %v488 = vsel %vm431, %v483, 0
          %v491 = vsel %vm465, %v486, 0
          %493 = vmatpush.bf16.msra.mxu0 0
          %494 = vmatpush.bf16.msra.mxu0 0
          %495 = vmatpush.bf16.msra.mxu0 0
          %496 = vmatpush.bf16.msra.mxu0 0
          %497 = vmatpush.bf16.msra.mxu0 0
          %498 = vmatpush.bf16.msra.mxu0 0
          %499 = vmatpush.bf16.msra.mxu0 0
          %500 = vmatpush.bf16.msra.mxu0 %v491
          %501 = vmatmul.bf16.gmra.mxu0 %v488
          %v502 = vpop.f32.mrf.mxu0
          %v503 = vadd.f32 0.0, %v502
          %v504 = vpop.f32.mrf.mxu0
          %505 = vdwg.mxu0
          %v506 = vadd.f32 %v382, %v503
        $region61: #{tpu_custom_call.1} parent=47 // loop_footer
          %s381 = sadd.s32 1, %s377
        $region62: #{tpu_custom_call.1} parent=47 // loop_footer_branch
          %376 = sbr.rel target = $region58
        $region63: #{tpu_custom_call.1} parent=47 // loop_exit
          _
        %v507 = vld [vmem:[%s6] sm:$0x1]
        %v509 = vperm.slane %v507, 0
        %v511 = vadd.f32 %v382, %v509
        %vm512 = vcmask 261120
        %513 = vst.msk [vmem:[%s361] sm:$0xff] %vm512, %v511
        %s514 = sand.u32 %s211, 1
        %s515 = scalar_lea.sflag [#allocation4], %s514
        %s516 = sand.u32 %s211, 1
        %s517 = smul.addr %s516, 8
        %s518 = scalar_lea.vmem [#allocation7], %s517
        // Predicated region
        $region64: #{tpu_custom_call.1} parent=47 // pred_check
          %p519 = pneg %p221
        $region65: #{tpu_custom_call.1} parent=47 // pred_check_branch
          %521 = sbr.rel (%p519) target = $region67
        $region66: #{tpu_custom_call.1} parent=47 // pred_region
          %523 = vsyncadd %s515, 0
          %s524 = sadd.s32 %s30, %s29
          %s525 = smul.addr %s524, 8
          %s526 = scalar_lea.hbm %s7, %s525
          %s528 = sshll.u32 %s518, 4
          %s529 = int_to_ptr.vmem [resolvable:$true] %s528
          %s530 = sshll.u32 %s526, 4
          %s531 = int_to_ptr.hbm [resolvable:$true] %s530
          %533 = dma.vmem_to_hbm [thread:$0]  %s529, 128, %s531, %s515
        $region67: #{tpu_custom_call.1} parent=47 // pred_fallthru
          _
      $region48: #{tpu_custom_call.1} parent=5 // pred_fallthru
        _
      %p534 = scmp.le.s32.totalorder 2, %s20
      // Predicated region
      $region68: #{tpu_custom_call.1} parent=5 // pred_check
        %p535 = pneg %p534
      $region69: #{tpu_custom_call.1} parent=5 // pred_check_branch
        %537 = sbr.rel (%p535) target = $region71
      $region70: #{tpu_custom_call.1} parent=5 // pred_region
        %s538 = ssub.s32 %s20, 2
        // Predicated region
        $region72: #{tpu_custom_call.1} parent=70 // pred_check
          %p539 = pneg %p227
        $region73: #{tpu_custom_call.1} parent=70 // pred_check_branch
          %541 = sbr.rel (%p539) target = $region75
        $region74: #{tpu_custom_call.1} parent=70 // pred_region
          %s542 = sand.u32 %s212, 1
          %s543 = scalar_lea.sflag [#allocation4], %s542
          %s544 = sand.u32 %s212, 1
          %s545 = smul.addr %s544, 8
          %s546 = scalar_lea.vmem [#allocation7], %s545
          %548 = dma.done %s543, 128
        $region75: #{tpu_custom_call.1} parent=70 // pred_fallthru
          _
      $region71: #{tpu_custom_call.1} parent=5 // pred_fallthru
        _
    $region6: #{tpu_custom_call.1} parent=1 // loop_footer
      %s24 = sadd.s32 1, %s20
    $region7: #{tpu_custom_call.1} parent=1 // loop_footer_branch
      %19 = sbr.rel target = $region3
    $region8: #{tpu_custom_call.1} parent=1 // loop_exit
      _
    %549 = vsyncpa [#allocation3], 1
    %s550 = scalar_lea.sflag [#allocation3], 1
    %551 = vsyncpa %s550, 1
    %552 = vsyncpa [#allocation6], 1
    %553 = vsyncpa [#allocation4], 1
    %s554 = scalar_lea.sflag [#allocation4], 1
    %555 = vsyncpa %s554, 1

</llo_original>
